<compile_context>
chip_gen: v6e
topology: v6e:2x2x1
jax: 0.10.0
libtpu: 0.0.40
codegen_flags: <defaults>
</compile_context>

<pallas_src>
import functools

import jax
import jax.numpy as jnp
from jax.experimental import pallas as pl
from jax.experimental.pallas import tpu as pltpu

HIDDEN = 256
BN_EPS = 1e-5
LANE = 128
SUB = 8

# Scoped-VMEM request: sized to the fused path's worst case (<= FUSED_MAX_ROWS
# rows of f32 activations), comfortably below physical VMEM on v5e/v6e
# (128 MiB) and v7x (64 MiB).
VMEM_LIMIT_BYTES = 32 * 1024 * 1024
FUSED_MAX_ROWS = 1024        # above this, switch to the batch-tiled path
DEFAULT_TILE_ROWS = 512      # batch tile for the tiled path (multiple of 8)


def _round_up(n, m):
    return (n + m - 1) // m * m


def _pack_rows(rows, width):
    """Stack small 1-D vectors into one zero-padded (SUB, width) f32 array."""
    out = jnp.zeros((SUB, width), jnp.float32)
    for i, r in enumerate(rows):
        r = r.reshape(-1).astype(jnp.float32)
        out = out.at[i, : r.shape[0]].set(r)
    return out


# ---------------------------------------------------------------------------
# Fused single-call kernel (whole padded batch resident in VMEM).
# ---------------------------------------------------------------------------
def _fused_kernel(x_ref, w0_ref, w1_ref, w2_ref, w3_ref, vec_ref, out_ref, *,
                  n_valid, needs_mask):
    x = x_ref[...]
    bpad = x.shape[0]
    inv_n = 1.0 / n_valid

    if needs_mask:
        row = jax.lax.broadcasted_iota(jnp.int32, (bpad, HIDDEN), 0)
        valid = row < n_valid
    else:
        valid = None

    def bn_relu(h, g, be):
        # Padded rows of h are exactly zero, so plain column sums equal the
        # sums over the n_valid real rows; divide by n_valid (not bpad).
        mean = jnp.sum(h, axis=0, keepdims=True) * inv_n
        ex2 = jnp.sum(h * h, axis=0, keepdims=True) * inv_n
        var = ex2 - mean * mean
        scale = g * jax.lax.rsqrt(var + BN_EPS)        # (1, HIDDEN)
        shift = be - mean * scale
        a = jnp.maximum(h * scale + shift, 0.0)
        if needs_mask:
            a = jnp.where(valid, a, 0.0)               # keep padded rows zero
        return a

    # Linear(input, 256) -> BN -> ReLU   (pre-BN bias cancelled by BN: dropped)
    h = jnp.dot(x.astype(jnp.bfloat16), w0_ref[...],
                preferred_element_type=jnp.float32)
    h = bn_relu(h, vec_ref[0:1, :HIDDEN], vec_ref[1:2, :HIDDEN])

    h = jnp.dot(h.astype(jnp.bfloat16), w1_ref[...],
                preferred_element_type=jnp.float32)
    h = bn_relu(h, vec_ref[2:3, :HIDDEN], vec_ref[3:4, :HIDDEN])

    h = jnp.dot(h.astype(jnp.bfloat16), w2_ref[...],
                preferred_element_type=jnp.float32)
    h = bn_relu(h, vec_ref[4:5, :HIDDEN], vec_ref[5:6, :HIDDEN])

    # Output: Linear(256, out) + b3 -> sigmoid
    logits = jnp.dot(h.astype(jnp.bfloat16), w3_ref[...],
                     preferred_element_type=jnp.float32)
    logits = logits + vec_ref[6:7, : logits.shape[1]]
    out_ref[...] = jax.nn.sigmoid(logits)


def _forward_fused(x_pad, kp, n_valid, out_size):
    bpad = x_pad.shape[0]
    out_pad = kp["w3"].shape[1]
    kernel = functools.partial(_fused_kernel, n_valid=n_valid,
                               needs_mask=(bpad != n_valid))
    vmem = pl.BlockSpec(memory_space=pltpu.MemorySpace.VMEM)
    out = pl.pallas_call(
        kernel,
        out_shape=jax.ShapeDtypeStruct((bpad, out_pad), jnp.float32),
        in_specs=[vmem] * 6,
        out_specs=vmem,
        compiler_params=pltpu.CompilerParams(vmem_limit_bytes=VMEM_LIMIT_BYTES),
    )(x_pad, kp["w0"], kp["w1"], kp["w2"], kp["w3"], kp["vecs"])
    return out[:n_valid, :out_size]


# ---------------------------------------------------------------------------
# Batch-tiled 4-pass path (for large batches).  Each pass streams batch tiles
# with BlockSpec auto-pipelining on a "parallel" grid axis and emits per-tile
# BN partial sums (row 0 = sum, row 1 = sum of squares, rows 2..7 don't-care).
# ---------------------------------------------------------------------------
def _first_kernel(x_ref, w_ref, h_ref, stat_ref):
    h = jnp.dot(x_ref[...].astype(jnp.bfloat16), w_ref[...],
                preferred_element_type=jnp.float32)
    h_ref[...] = h
    stat_ref[0:1, :] = jnp.sum(h, axis=0, keepdims=True)
    stat_ref[1:2, :] = jnp.sum(h * h, axis=0, keepdims=True)


def _mid_kernel(h_ref, w_ref, ss_ref, out_ref, stat_ref, *,
                tile_rows, n_valid, needs_mask):
    h = h_ref[...]
    a = jnp.maximum(h * ss_ref[0:1, :HIDDEN] + ss_ref[1:2, :HIDDEN], 0.0)
    if needs_mask:
        row = (jax.lax.broadcasted_iota(jnp.int32, a.shape, 0)
               + pl.program_id(0) * tile_rows)
        a = jnp.where(row < n_valid, a, 0.0)   # zero padded rows before stats
    hn = jnp.dot(a.astype(jnp.bfloat16), w_ref[...],
                 preferred_element_type=jnp.float32)
    out_ref[...] = hn
    stat_ref[0:1, :] = jnp.sum(hn, axis=0, keepdims=True)
    stat_ref[1:2, :] = jnp.sum(hn * hn, axis=0, keepdims=True)


def _last_kernel(h_ref, w_ref, ss_ref, out_ref):
    h = h_ref[...]
    a = jnp.maximum(h * ss_ref[0:1, :HIDDEN] + ss_ref[1:2, :HIDDEN], 0.0)
    logits = jnp.dot(a.astype(jnp.bfloat16), w_ref[...],
                     preferred_element_type=jnp.float32)
    logits = logits + ss_ref[2:3, : logits.shape[1]]
    out_ref[...] = jax.nn.sigmoid(logits)


def _scale_shift(stats, gamma, beta, n_valid):
    """Reduce per-tile (sum, sum_sq) partials -> fused BN scale/shift (f32)."""
    st = stats.reshape(-1, SUB, HIDDEN)
    s = jnp.sum(st[:, 0, :], axis=0)
    s2 = jnp.sum(st[:, 1, :], axis=0)
    mean = s / n_valid
    var = s2 / n_valid - mean * mean
    scale = gamma * jax.lax.rsqrt(var + BN_EPS)
    shift = beta - mean * scale
    return scale, shift


def _forward_tiled(x_pad, kp, n_valid, out_size, tile_rows):
    bpad, in_pad = x_pad.shape
    assert tile_rows % SUB == 0 and bpad % tile_rows == 0
    num_tiles = bpad // tile_rows
    out_pad = kp["w3"].shape[1]
    needs_mask = bpad != n_valid

    cp = pltpu.CompilerParams(dimension_semantics=("parallel",),
                              vmem_limit_bytes=VMEM_LIMIT_BYTES)
    grid = (num_tiles,)
    h_shape = jax.ShapeDtypeStruct((bpad, HIDDEN), jnp.float32)
    st_shape = jax.ShapeDtypeStruct((num_tiles * SUB, HIDDEN), jnp.float32)
    h_spec = pl.BlockSpec((tile_rows, HIDDEN), lambda i: (i, 0))
    st_spec = pl.BlockSpec((SUB, HIDDEN), lambda i: (i, 0))
    w_spec = pl.BlockSpec((HIDDEN, HIDDEN), lambda i: (0, 0))
    ss_spec = pl.BlockSpec((SUB, HIDDEN), lambda i: (0, 0))

    # Pass 1: h0 = x @ W0, plus BN0 partial sums.
    h0, st0 = pl.pallas_call(
        _first_kernel, grid=grid,
        in_specs=[pl.BlockSpec((tile_rows, in_pad), lambda i: (i, 0)),
                  pl.BlockSpec((in_pad, HIDDEN), lambda i: (0, 0))],
        out_specs=(h_spec, st_spec),
        out_shape=(h_shape, st_shape),
        compiler_params=cp,
    )(x_pad, kp["w0"])

    mid = functools.partial(_mid_kernel, tile_rows=tile_rows, n_valid=n_valid,
                            needs_mask=needs_mask)

    # Pass 2: h1 = relu(BN0(h0)) @ W1, plus BN1 partial sums.
    sc0, sh0 = _scale_shift(st0, kp["g0"], kp["be0"], n_valid)
    h1, st1 = pl.pallas_call(
        mid, grid=grid,
        in_specs=[h_spec, w_spec, ss_spec],
        out_specs=(h_spec, st_spec),
        out_shape=(h_shape, st_shape),
        compiler_params=cp,
    )(h0, kp["w1"], _pack_rows([sc0, sh0], HIDDEN))

    # Pass 3: h2 = relu(BN1(h1)) @ W2, plus BN2 partial sums.
    sc1, sh1 = _scale_shift(st1, kp["g1"], kp["be1"], n_valid)
    h2, st2 = pl.pallas_call(
        mid, grid=grid,
        in_specs=[h_spec, w_spec, ss_spec],
        out_specs=(h_spec, st_spec),
        out_shape=(h_shape, st_shape),
        compiler_params=cp,
    )(h1, kp["w2"], _pack_rows([sc1, sh1], HIDDEN))

    # Pass 4: sigmoid(relu(BN2(h2)) @ W3 + b3).
    sc2, sh2 = _scale_shift(st2, kp["g2"], kp["be2"], n_valid)
    vec_w = max(HIDDEN, out_pad)
    out = pl.pallas_call(
        _last_kernel, grid=grid,
        in_specs=[h_spec,
                  pl.BlockSpec((HIDDEN, out_pad), lambda i: (0, 0)),
                  pl.BlockSpec((SUB, vec_w), lambda i: (0, 0))],
        out_specs=pl.BlockSpec((tile_rows, out_pad), lambda i: (i, 0)),
        out_shape=jax.ShapeDtypeStruct((bpad, out_pad), jnp.float32),
        compiler_params=cp,
    )(h2, kp["w3"], _pack_rows([sc2, sh2, kp["b3"]], vec_w))

    return out[:n_valid, :out_size]


# ---------------------------------------------------------------------------
# Public forward + parameter preparation.
# ---------------------------------------------------------------------------
@functools.partial(jax.jit,
                   static_argnames=("output_size", "tile_rows", "fused_max_rows"))
def face_mi_forward(x, kernel_params, *, output_size,
                    tile_rows=DEFAULT_TILE_ROWS, fused_max_rows=FUSED_MAX_ROWS):
    b = x.shape[0]
    in_pad = kernel_params["w0"].shape[0]
    if b <= fused_max_rows:
        bpad = _round_up(max(b, SUB), SUB)
    else:
        bpad = _round_up(b, tile_rows)
    x_pad = jnp.zeros((bpad, in_pad), jnp.float32)
    x_pad = x_pad.at[:b, : x.shape[1]].set(x.astype(jnp.float32))
    if b <= fused_max_rows:
        return _forward_fused(x_pad, kernel_params, b, output_size)
    return _forward_tiled(x_pad, kernel_params, b, output_size, tile_rows)


def prepare_kernel_params(p):
    """Pad / cast the f32 module parameters for the kernels.

    Weights are (in_features, out_features) -> bf16 (MXU-native), features
    zero-padded to multiples of 128 lanes.  Dead pre-BN biases are dropped.
    """
    input_size = p["w0"].shape[0]
    output_size = p["w3"].shape[1]
    in_pad = _round_up(input_size, LANE)
    out_pad = _round_up(output_size, LANE)

    w0 = jnp.zeros((in_pad, HIDDEN), jnp.float32).at[:input_size, :].set(p["w0"])
    w3 = jnp.zeros((HIDDEN, out_pad), jnp.float32).at[:, :output_size].set(p["w3"])
    b3 = jnp.zeros((out_pad,), jnp.float32).at[:output_size].set(p["b3"].reshape(-1))

    g = {k: p[k].reshape(-1).astype(jnp.float32)
         for k in ("g0", "be0", "g1", "be1", "g2", "be2")}
    vec_w = max(HIDDEN, out_pad)
    vecs = _pack_rows(
        [g["g0"], g["be0"], g["g1"], g["be1"], g["g2"], g["be2"], b3], vec_w)

    return dict(w0=w0.astype(jnp.bfloat16), w1=p["w1"].astype(jnp.bfloat16),
                w2=p["w2"].astype(jnp.bfloat16), w3=w3.astype(jnp.bfloat16),
                b3=b3, vecs=vecs, **g)


def init_params(key, input_size, output_size):
    """Deterministic synthetic f32 parameters (PyTorch-style, incl. biases)."""
    ks = jax.random.split(key, 8)

    def lin(kw, kb, fan_in, fan_out):
        w = jax.random.normal(kw, (fan_in, fan_out), jnp.float32) * 0.05
        b = jax.random.normal(kb, (1, fan_out), jnp.float32) * 0.05
        return w, b

    w0, b0 = lin(ks[0], ks[1], input_size, HIDDEN)
    w1, b1 = lin(ks[2], ks[3], HIDDEN, HIDDEN)
    w2, b2 = lin(ks[4], ks[5], HIDDEN, HIDDEN)
    w3, b3 = lin(ks[6], ks[7], HIDDEN, output_size)

    def bn(seed):
        k1, k2 = jax.random.split(jax.random.PRNGKey(seed))
        gamma = 1.0 + 0.1 * jax.random.normal(k1, (1, HIDDEN), jnp.float32)
        beta = 0.1 * jax.random.normal(k2, (1, HIDDEN), jnp.float32)
        return gamma, beta

    g0, be0 = bn(100)
    g1, be1 = bn(101)
    g2, be2 = bn(102)

    return dict(w0=w0, b0=b0, g0=g0, be0=be0,
                w1=w1, b1=b1, g1=g1, be1=be1,
                w2=w2, b2=b2, g2=g2, be2=be2,
                w3=w3, b3=b3)


def reference_forward(x, p):
    """Pure-JAX f32 reference matching PyTorch training-mode forward
    (includes the pre-BN biases, which the kernel provably drops)."""
    def bn_relu(h, g, be):
        mean = jnp.mean(h, axis=0, keepdims=True)
        var = jnp.mean((h - mean) ** 2, axis=0, keepdims=True)
        return jnp.maximum((h - mean) / jnp.sqrt(var + BN_EPS) * g + be, 0.0)

    h = bn_relu(x @ p["w0"] + p["b0"], p["g0"], p["be0"])
    h = bn_relu(h @ p["w1"] + p["b1"], p["g1"], p["be1"])
    h = bn_relu(h @ p["w2"] + p["b2"], p["g2"], p["be2"])
    return jax.nn.sigmoid(h @ p["w3"] + p["b3"])


if __name__ == "__main__":
    key = jax.random.PRNGKey(0)
    k_x, k_p = jax.random.split(key)

    batch, input_size, output_size = 30, 64, 8   # 30 exercises row-mask paths

    x = jax.random.normal(k_x, (batch, input_size), jnp.float32)
    params = init_params(k_p, input_size, output_size)
    kparams = prepare_kernel_params(params)

    ref = reference_forward(x, params)

    # Fused single-call path (default for small / moderate batch).
    out_fused = jax.block_until_ready(
        face_mi_forward(x, kparams, output_size=output_size))
    assert out_fused.shape == (batch, output_size)
    assert jnp.allclose(out_fused, ref, atol=3e-2), "fused path mismatch"

    # Batch-tiled 4-pass path (forced here with a tiny tile to validate it).
    out_tiled = jax.block_until_ready(
        face_mi_forward(x, kparams, output_size=output_size,
                        tile_rows=8, fused_max_rows=0))
    assert out_tiled.shape == (batch, output_size)
    assert jnp.allclose(out_tiled, ref, atol=3e-2), "tiled path mismatch"

    print("KERNEL_OK")
</pallas_src>

<mosaic_0001>
module attributes {stable_mosaic.version = 11 : i64} {
  func.func @_fused_kernel(%arg0: memref<32x128xf32, #tpu.memory_space<vmem>>, %arg1: memref<128x256xbf16, #tpu.memory_space<vmem>>, %arg2: memref<256x256xbf16, #tpu.memory_space<vmem>>, %arg3: memref<256x256xbf16, #tpu.memory_space<vmem>>, %arg4: memref<256x128xbf16, #tpu.memory_space<vmem>>, %arg5: memref<8x256xf32, #tpu.memory_space<vmem>>, %arg6: memref<32x128xf32, #tpu.memory_space<vmem>>) attributes {dimension_semantics = [], scalar_prefetch = 0 : i64, scratch_operands = 0 : i64, tpu.core_type = #tpu.core_type<tc>} {
    %c0 = arith.constant 0 : index
    %c0_0 = arith.constant 0 : index
    %0 = vector.load %arg0[%c0, %c0_0] : memref<32x128xf32, #tpu.memory_space<vmem>>, vector<32x128xf32>
    %1 = tpu.iota {dimensions = array<i32: 0>} : vector<32x256xi32>
    %c30_i32 = arith.constant 30 : i32
    %2 = vector.broadcast %c30_i32 : i32 to vector<32x256xi32>
    %3 = arith.cmpi slt, %1, %2 : vector<32x256xi32>
    %4 = arith.truncf %0 : vector<32x128xf32> to vector<32x128xbf16>
    %c0_1 = arith.constant 0 : index
    %c0_2 = arith.constant 0 : index
    %5 = vector.load %arg1[%c0_1, %c0_2] : memref<128x256xbf16, #tpu.memory_space<vmem>>, vector<128x256xbf16>
    %cst = arith.constant dense<0.000000e+00> : vector<32x256xf32>
    %6 = tpu.matmul %4, %5, %cst {dimension_numbers = #tpu.dot_dimension_numbers<[1], [0], [0], [1], [0, 0, 1, 1], [], []>} : vector<32x128xbf16>, vector<128x256xbf16>, vector<32x256xf32> -> vector<32x256xf32>
    %c0_3 = arith.constant 0 : index
    %c0_4 = arith.constant 0 : index
    %7 = vector.load %arg5[%c0_3, %c0_4] : memref<8x256xf32, #tpu.memory_space<vmem>>, vector<1x256xf32>
    %c1 = arith.constant 1 : index
    %c0_5 = arith.constant 0 : index
    %8 = vector.load %arg5[%c1, %c0_5] : memref<8x256xf32, #tpu.memory_space<vmem>>, vector<1x256xf32>
    %cst_6 = arith.constant dense<0.000000e+00> : vector<256xf32>
    %9 = vector.multi_reduction <add>, %6, %cst_6 [0] : vector<32x256xf32> to vector<256xf32>
    %10 = vector.shape_cast %9 : vector<256xf32> to vector<1x256xf32>
    %cst_7 = arith.constant 0.0333333351 : f32
    %11 = vector.broadcast %cst_7 : f32 to vector<1x256xf32>
    %12 = arith.mulf %10, %11 : vector<1x256xf32>
    %13 = arith.mulf %6, %6 : vector<32x256xf32>
    %cst_8 = arith.constant dense<0.000000e+00> : vector<256xf32>
    %14 = vector.multi_reduction <add>, %13, %cst_8 [0] : vector<32x256xf32> to vector<256xf32>
    %15 = vector.shape_cast %14 : vector<256xf32> to vector<1x256xf32>
    %cst_9 = arith.constant 0.0333333351 : f32
    %16 = vector.broadcast %cst_9 : f32 to vector<1x256xf32>
    %17 = arith.mulf %15, %16 : vector<1x256xf32>
    %18 = arith.mulf %12, %12 : vector<1x256xf32>
    %19 = arith.subf %17, %18 : vector<1x256xf32>
    %cst_10 = arith.constant 9.99999974E-6 : f32
    %20 = vector.broadcast %cst_10 : f32 to vector<1x256xf32>
    %21 = arith.addf %19, %20 : vector<1x256xf32>
    %22 = math.rsqrt %21 : vector<1x256xf32>
    %23 = arith.mulf %7, %22 : vector<1x256xf32>
    %24 = arith.mulf %12, %23 : vector<1x256xf32>
    %25 = arith.subf %8, %24 : vector<1x256xf32>
    %26 = vector.broadcast %23 : vector<1x256xf32> to vector<32x256xf32>
    %27 = arith.mulf %6, %26 : vector<32x256xf32>
    %28 = vector.broadcast %25 : vector<1x256xf32> to vector<32x256xf32>
    %29 = arith.addf %27, %28 : vector<32x256xf32>
    %cst_11 = arith.constant 0.000000e+00 : f32
    %30 = vector.broadcast %cst_11 : f32 to vector<32x256xf32>
    %31 = arith.maximumf %29, %30 : vector<32x256xf32>
    %cst_12 = arith.constant 0.000000e+00 : f32
    %32 = vector.broadcast %cst_12 : f32 to vector<32x256xf32>
    %33 = arith.select %3, %31, %32 : vector<32x256xi1>, vector<32x256xf32>
    %34 = arith.truncf %33 : vector<32x256xf32> to vector<32x256xbf16>
    %c0_13 = arith.constant 0 : index
    %c0_14 = arith.constant 0 : index
    %35 = vector.load %arg2[%c0_13, %c0_14] : memref<256x256xbf16, #tpu.memory_space<vmem>>, vector<256x256xbf16>
    %cst_15 = arith.constant dense<0.000000e+00> : vector<32x256xf32>
    %36 = tpu.matmul %34, %35, %cst_15 {dimension_numbers = #tpu.dot_dimension_numbers<[1], [0], [0], [1], [0, 0, 1, 1], [], []>} : vector<32x256xbf16>, vector<256x256xbf16>, vector<32x256xf32> -> vector<32x256xf32>
    %c2 = arith.constant 2 : index
    %c0_16 = arith.constant 0 : index
    %37 = vector.load %arg5[%c2, %c0_16] : memref<8x256xf32, #tpu.memory_space<vmem>>, vector<1x256xf32>
    %c3 = arith.constant 3 : index
    %c0_17 = arith.constant 0 : index
    %38 = vector.load %arg5[%c3, %c0_17] : memref<8x256xf32, #tpu.memory_space<vmem>>, vector<1x256xf32>
    %cst_18 = arith.constant dense<0.000000e+00> : vector<256xf32>
    %39 = vector.multi_reduction <add>, %36, %cst_18 [0] : vector<32x256xf32> to vector<256xf32>
    %40 = vector.shape_cast %39 : vector<256xf32> to vector<1x256xf32>
    %cst_19 = arith.constant 0.0333333351 : f32
    %41 = vector.broadcast %cst_19 : f32 to vector<1x256xf32>
    %42 = arith.mulf %40, %41 : vector<1x256xf32>
    %43 = arith.mulf %36, %36 : vector<32x256xf32>
    %cst_20 = arith.constant dense<0.000000e+00> : vector<256xf32>
    %44 = vector.multi_reduction <add>, %43, %cst_20 [0] : vector<32x256xf32> to vector<256xf32>
    %45 = vector.shape_cast %44 : vector<256xf32> to vector<1x256xf32>
    %cst_21 = arith.constant 0.0333333351 : f32
    %46 = vector.broadcast %cst_21 : f32 to vector<1x256xf32>
    %47 = arith.mulf %45, %46 : vector<1x256xf32>
    %48 = arith.mulf %42, %42 : vector<1x256xf32>
    %49 = arith.subf %47, %48 : vector<1x256xf32>
    %cst_22 = arith.constant 9.99999974E-6 : f32
    %50 = vector.broadcast %cst_22 : f32 to vector<1x256xf32>
    %51 = arith.addf %49, %50 : vector<1x256xf32>
    %52 = math.rsqrt %51 : vector<1x256xf32>
    %53 = arith.mulf %37, %52 : vector<1x256xf32>
    %54 = arith.mulf %42, %53 : vector<1x256xf32>
    %55 = arith.subf %38, %54 : vector<1x256xf32>
    %56 = vector.broadcast %53 : vector<1x256xf32> to vector<32x256xf32>
    %57 = arith.mulf %36, %56 : vector<32x256xf32>
    %58 = vector.broadcast %55 : vector<1x256xf32> to vector<32x256xf32>
    %59 = arith.addf %57, %58 : vector<32x256xf32>
    %cst_23 = arith.constant 0.000000e+00 : f32
    %60 = vector.broadcast %cst_23 : f32 to vector<32x256xf32>
    %61 = arith.maximumf %59, %60 : vector<32x256xf32>
    %cst_24 = arith.constant 0.000000e+00 : f32
    %62 = vector.broadcast %cst_24 : f32 to vector<32x256xf32>
    %63 = arith.select %3, %61, %62 : vector<32x256xi1>, vector<32x256xf32>
    %64 = arith.truncf %63 : vector<32x256xf32> to vector<32x256xbf16>
    %c0_25 = arith.constant 0 : index
    %c0_26 = arith.constant 0 : index
    %65 = vector.load %arg3[%c0_25, %c0_26] : memref<256x256xbf16, #tpu.memory_space<vmem>>, vector<256x256xbf16>
    %cst_27 = arith.constant dense<0.000000e+00> : vector<32x256xf32>
    %66 = tpu.matmul %64, %65, %cst_27 {dimension_numbers = #tpu.dot_dimension_numbers<[1], [0], [0], [1], [0, 0, 1, 1], [], []>} : vector<32x256xbf16>, vector<256x256xbf16>, vector<32x256xf32> -> vector<32x256xf32>
    %c4 = arith.constant 4 : index
    %c0_28 = arith.constant 0 : index
    %67 = vector.load %arg5[%c4, %c0_28] : memref<8x256xf32, #tpu.memory_space<vmem>>, vector<1x256xf32>
    %c5 = arith.constant 5 : index
    %c0_29 = arith.constant 0 : index
    %68 = vector.load %arg5[%c5, %c0_29] : memref<8x256xf32, #tpu.memory_space<vmem>>, vector<1x256xf32>
    %cst_30 = arith.constant dense<0.000000e+00> : vector<256xf32>
    %69 = vector.multi_reduction <add>, %66, %cst_30 [0] : vector<32x256xf32> to vector<256xf32>
    %70 = vector.shape_cast %69 : vector<256xf32> to vector<1x256xf32>
    %cst_31 = arith.constant 0.0333333351 : f32
    %71 = vector.broadcast %cst_31 : f32 to vector<1x256xf32>
    %72 = arith.mulf %70, %71 : vector<1x256xf32>
    %73 = arith.mulf %66, %66 : vector<32x256xf32>
    %cst_32 = arith.constant dense<0.000000e+00> : vector<256xf32>
    %74 = vector.multi_reduction <add>, %73, %cst_32 [0] : vector<32x256xf32> to vector<256xf32>
    %75 = vector.shape_cast %74 : vector<256xf32> to vector<1x256xf32>
    %cst_33 = arith.constant 0.0333333351 : f32
    %76 = vector.broadcast %cst_33 : f32 to vector<1x256xf32>
    %77 = arith.mulf %75, %76 : vector<1x256xf32>
    %78 = arith.mulf %72, %72 : vector<1x256xf32>
    %79 = arith.subf %77, %78 : vector<1x256xf32>
    %cst_34 = arith.constant 9.99999974E-6 : f32
    %80 = vector.broadcast %cst_34 : f32 to vector<1x256xf32>
    %81 = arith.addf %79, %80 : vector<1x256xf32>
    %82 = math.rsqrt %81 : vector<1x256xf32>
    %83 = arith.mulf %67, %82 : vector<1x256xf32>
    %84 = arith.mulf %72, %83 : vector<1x256xf32>
    %85 = arith.subf %68, %84 : vector<1x256xf32>
    %86 = vector.broadcast %83 : vector<1x256xf32> to vector<32x256xf32>
    %87 = arith.mulf %66, %86 : vector<32x256xf32>
    %88 = vector.broadcast %85 : vector<1x256xf32> to vector<32x256xf32>
    %89 = arith.addf %87, %88 : vector<32x256xf32>
    %cst_35 = arith.constant 0.000000e+00 : f32
    %90 = vector.broadcast %cst_35 : f32 to vector<32x256xf32>
    %91 = arith.maximumf %89, %90 : vector<32x256xf32>
    %cst_36 = arith.constant 0.000000e+00 : f32
    %92 = vector.broadcast %cst_36 : f32 to vector<32x256xf32>
    %93 = arith.select %3, %91, %92 : vector<32x256xi1>, vector<32x256xf32>
    %94 = arith.truncf %93 : vector<32x256xf32> to vector<32x256xbf16>
    %c0_37 = arith.constant 0 : index
    %c0_38 = arith.constant 0 : index
    %95 = vector.load %arg4[%c0_37, %c0_38] : memref<256x128xbf16, #tpu.memory_space<vmem>>, vector<256x128xbf16>
    %cst_39 = arith.constant dense<0.000000e+00> : vector<32x128xf32>
    %96 = tpu.matmul %94, %95, %cst_39 {dimension_numbers = #tpu.dot_dimension_numbers<[1], [0], [0], [1], [0, 0, 1, 1], [], []>} : vector<32x256xbf16>, vector<256x128xbf16>, vector<32x128xf32> -> vector<32x128xf32>
    %c6 = arith.constant 6 : index
    %c0_40 = arith.constant 0 : index
    %97 = vector.load %arg5[%c6, %c0_40] : memref<8x256xf32, #tpu.memory_space<vmem>>, vector<1x128xf32>
    %98 = vector.broadcast %97 : vector<1x128xf32> to vector<32x128xf32>
    %99 = arith.addf %96, %98 : vector<32x128xf32>
    %100 = arith.negf %99 : vector<32x128xf32>
    %101 = math.exp %100 : vector<32x128xf32>
    %cst_41 = arith.constant 1.000000e+00 : f32
    %102 = vector.broadcast %cst_41 : f32 to vector<32x128xf32>
    %103 = arith.addf %102, %101 : vector<32x128xf32>
    %104 = arith.divf %102, %103 : vector<32x128xf32>
    %c0_42 = arith.constant 0 : index
    %c0_43 = arith.constant 0 : index
    %105 = vector.load %arg6[%c0_42, %c0_43] : memref<32x128xf32, #tpu.memory_space<vmem>>, vector<32x128xf32>
    tpu.vector_store %arg6[%c0_42, %c0_43], %104 {strides = array<i32>} : memref<32x128xf32, #tpu.memory_space<vmem>>, vector<32x128xf32>,
    return
  }
}

</mosaic_0001>

<llo_original>
// kernel: face_mi_forward.1
$region0: #{face_mi_forward.1}
  #allocation0 [shape = 'u32[]', space=smem, size = 0x4, offset = 0x4, fixed_abs, tag = 'smem constant byte address 0x4 - core index']
  #allocation1 [shape = 'u32[144,128]{1,0:T(1,128)}', space=vmem, size = 0x12000, scoped, tag = 'internal scratch']
  %s0 = inlined_call_operand.vmem [shape: f32[32,128], index: 0, kind: input, shape index: {}]
  %s1 = inlined_call_operand.hbm [shape: bf16[128,256], index: 1, kind: input, shape index: {}]
  %s2 = inlined_call_operand.hbm [shape: bf16[256,256], index: 2, kind: input, shape index: {}]
  %s3 = inlined_call_operand.hbm [shape: bf16[256,256], index: 3, kind: input, shape index: {}]
  %s4 = inlined_call_operand.hbm [shape: bf16[256,128], index: 4, kind: input, shape index: {}]
  %s5 = inlined_call_operand.vmem [shape: f32[8,256], index: 5, kind: input, shape index: {}]
  %s6 = inlined_call_operand.vmem [shape: f32[32,128], index: 6, kind: output, shape index: {}]
  %s7 = sld [smem:[#allocation0]]
  $region50: #{face_mi_forward.1} parent=0
    _
  %s9 = ssub.s32 1, %s7
  %s10 = scalar_select 0, %s9, %s7
  $region1: #{face_mi_forward.1} parent=0
    #allocation2 [shape = 'u8[65536]{0}', space=vmem, size = 0x10000, scoped, tag = 'input window, operand 1, single buffered']
    #allocation3 [shape = 's32[1]{0}', space=sflag, size = 0x4, scoped, tag = 'scoped memory for face_mi_forward.1']
    #allocation4 [shape = 'u8[131072]{0}', space=vmem, size = 0x20000, scoped, tag = 'input window, operand 2, single buffered']
    #allocation5 [shape = 's32[1]{0}', space=sflag, size = 0x4, scoped, tag = 'scoped memory for face_mi_forward.1']
    #allocation6 [shape = 'u8[131072]{0}', space=vmem, size = 0x20000, scoped, tag = 'input window, operand 3, single buffered']
    #allocation7 [shape = 'u8[65536]{0}', space=vmem, size = 0x10000, scoped, tag = 'input window, operand 4, single buffered']
    #allocation8 [shape = 's32[1]{0}', space=sflag, size = 0x4, scoped, tag = 'scoped memory for face_mi_forward.1']
    %11 = vsyncpa [#allocation3], 0
    %12 = vsyncpa [#allocation5], 0
    %13 = vsyncpa [#allocation8], 0
    // Predicated region
    $region2: #{face_mi_forward.1} parent=1 // pred_check
      _
    $region3: #{face_mi_forward.1} parent=1 // pred_check_branch
      %15 = sbr.rel (0) target = $region5
    $region4: #{face_mi_forward.1} parent=1 // pred_region
      _
    $region5: #{face_mi_forward.1} parent=1 // pred_fallthru
      _
    // Predicated region
    $region6: #{face_mi_forward.1} parent=1 // pred_check
      _
    $region7: #{face_mi_forward.1} parent=1 // pred_check_branch
      %17 = sbr.rel (0) target = $region9
    $region8: #{face_mi_forward.1} parent=1 // pred_region
      %s19 = ssub.s32 2048, 2048
      %20 = vsyncadd [#allocation3], %s19
      %s21 = sshll.u32 [#allocation2], 4
      %s22 = int_to_ptr.vmem [resolvable:$true] %s21
      %27 = dma.hbm_to_vmem [thread:$0]  %s1, 2048, %s22, [#allocation3], 128, 128, 8
    $region9: #{face_mi_forward.1} parent=1 // pred_fallthru
      _
    // Predicated region
    $region10: #{face_mi_forward.1} parent=1 // pred_check
      _
    $region11: #{face_mi_forward.1} parent=1 // pred_check_branch
      %29 = sbr.rel (0) target = $region13
    $region12: #{face_mi_forward.1} parent=1 // pred_region
      %s31 = ssub.s32 4096, 4096
      %32 = vsyncadd [#allocation5], %s31
      %s33 = sshll.u32 [#allocation4], 4
      %s34 = int_to_ptr.vmem [resolvable:$true] %s33
      %39 = dma.hbm_to_vmem [thread:$0]  %s2, 4096, %s34, [#allocation5], 128, 128, 8
    $region13: #{face_mi_forward.1} parent=1 // pred_fallthru
      _
    // Predicated region
    $region14: #{face_mi_forward.1} parent=1 // pred_check
      _
    $region15: #{face_mi_forward.1} parent=1 // pred_check_branch
      %41 = sbr.rel (0) target = $region17
    $region16: #{face_mi_forward.1} parent=1 // pred_region
      %s43 = ssub.s32 4096, 4096
      %44 = vsyncadd [#allocation5], %s43
      %s45 = sshll.u32 [#allocation6], 4
      %s46 = int_to_ptr.vmem [resolvable:$true] %s45
      %51 = dma.hbm_to_vmem [thread:$0]  %s3, 4096, %s46, [#allocation5], 128, 128, 8
    $region17: #{face_mi_forward.1} parent=1 // pred_fallthru
      _
    // Predicated region
    $region18: #{face_mi_forward.1} parent=1 // pred_check
      _
    $region19: #{face_mi_forward.1} parent=1 // pred_check_branch
      %53 = sbr.rel (0) target = $region21
    $region20: #{face_mi_forward.1} parent=1 // pred_region
      %s55 = ssub.s32 2048, 2048
      %56 = vsyncadd [#allocation8], %s55
      %s57 = sshll.u32 [#allocation7], 4
      %s58 = int_to_ptr.vmem [resolvable:$true] %s57
      %63 = dma.hbm_to_vmem [thread:$0]  %s4, 2048, %s58, [#allocation8], 64, 64, 4
    $region21: #{face_mi_forward.1} parent=1 // pred_fallthru
      _
    // Predicated region
    $region22: #{face_mi_forward.1} parent=1 // pred_check
      _
    $region23: #{face_mi_forward.1} parent=1 // pred_check_branch
      %65 = sbr.rel (0) target = $region25
    $region24: #{face_mi_forward.1} parent=1 // pred_region
      _
    $region25: #{face_mi_forward.1} parent=1 // pred_fallthru
      _
    // Predicated region
    $region26: #{face_mi_forward.1} parent=1 // pred_check
      _
    $region27: #{face_mi_forward.1} parent=1 // pred_check_branch
      %67 = sbr.rel (0) target = $region29
    $region28: #{face_mi_forward.1} parent=1 // pred_region
      %68 = dma.done [#allocation3], 2048
    $region29: #{face_mi_forward.1} parent=1 // pred_fallthru
      _
    // Predicated region
    $region30: #{face_mi_forward.1} parent=1 // pred_check
      _
    $region31: #{face_mi_forward.1} parent=1 // pred_check_branch
      %70 = sbr.rel (0) target = $region33
    $region32: #{face_mi_forward.1} parent=1 // pred_region
      %71 = dma.done [#allocation5], 4096
    $region33: #{face_mi_forward.1} parent=1 // pred_fallthru
      _
    // Predicated region
    $region34: #{face_mi_forward.1} parent=1 // pred_check
      _
    $region35: #{face_mi_forward.1} parent=1 // pred_check_branch
      %73 = sbr.rel (0) target = $region37
    $region36: #{face_mi_forward.1} parent=1 // pred_region
      %74 = dma.done [#allocation5], 4096
    $region37: #{face_mi_forward.1} parent=1 // pred_fallthru
      _
    // Predicated region
    $region38: #{face_mi_forward.1} parent=1 // pred_check
      _
    $region39: #{face_mi_forward.1} parent=1 // pred_check_branch
      %76 = sbr.rel (0) target = $region41
    $region40: #{face_mi_forward.1} parent=1 // pred_region
      %77 = dma.done [#allocation8], 2048
    $region41: #{face_mi_forward.1} parent=1 // pred_fallthru
      _
    %v79 = vld [vmem:[%s0] sm:$0xff]
    %v80 = vld [vmem:[%s0 + $0x8] sm:$0xff]
    %v81 = vld [vmem:[%s0 + $0x10] sm:$0xff]
    %v82 = vld [vmem:[%s0 + $0x18] sm:$0xff]
    %v83 = vlaneseq
    %v84 = vshrl.u32 %v83, 7
    %v85 = vadd.s32 %v84, 8
    %v86 = vadd.s32 %v84, 16
    %v87 = vadd.s32 %v84, 24
    %vm88 = vcmp.lt.s32.totalorder %v84, 30
    %vm89 = vcmp.lt.s32.totalorder %v85, 30
    %vm90 = vcmp.lt.s32.totalorder %v86, 30
    %vm91 = vcmp.lt.s32.totalorder %v87, 30
    %v92 = vpack.c.bf16 %v80, %v79
    %v93 = vpack.c.bf16 %v82, %v81
    %v94 = vld [vmem:[#allocation2] sm:$0xff]
    %v95 = vld [vmem:[#allocation2 + $0x8] sm:$0xff]
    %v96 = vld [vmem:[#allocation2 + $0x10] sm:$0xff]
    %v97 = vld [vmem:[#allocation2 + $0x18] sm:$0xff]
    %v98 = vld [vmem:[#allocation2 + $0x20] sm:$0xff]
    %v99 = vld [vmem:[#allocation2 + $0x28] sm:$0xff]
    %v100 = vld [vmem:[#allocation2 + $0x30] sm:$0xff]
    %v101 = vld [vmem:[#allocation2 + $0x38] sm:$0xff]
    %v102 = vld [vmem:[#allocation2 + $0x40] sm:$0xff]
    %v103 = vld [vmem:[#allocation2 + $0x48] sm:$0xff]
    %v104 = vld [vmem:[#allocation2 + $0x50] sm:$0xff]
    %v105 = vld [vmem:[#allocation2 + $0x58] sm:$0xff]
    %v106 = vld [vmem:[#allocation2 + $0x60] sm:$0xff]
    %v107 = vld [vmem:[#allocation2 + $0x68] sm:$0xff]
    %v108 = vld [vmem:[#allocation2 + $0x70] sm:$0xff]
    %v109 = vld [vmem:[#allocation2 + $0x78] sm:$0xff]
    %v126 = vunpack.c.l.b16 %v94
    %v127 = vunpack.c.h.b16 %v94
    %v128 = vunpack.c.l.b16 %v95
    %v129 = vunpack.c.h.b16 %v95
    %v130 = vunpack.c.l.b16 %v96
    %v131 = vunpack.c.h.b16 %v96
    %v132 = vunpack.c.l.b16 %v97
    %v133 = vunpack.c.h.b16 %v97
    %v134 = vunpack.c.l.b16 %v98
    %v135 = vunpack.c.h.b16 %v98
    %v136 = vunpack.c.l.b16 %v99
    %v137 = vunpack.c.h.b16 %v99
    %v138 = vunpack.c.l.b16 %v100
    %v139 = vunpack.c.h.b16 %v100
    %v140 = vunpack.c.l.b16 %v101
    %v141 = vunpack.c.h.b16 %v101
    %v142 = vunpack.c.l.b16 %v102
    %v143 = vunpack.c.h.b16 %v102
    %v144 = vunpack.c.l.b16 %v103
    %v145 = vunpack.c.h.b16 %v103
    %v146 = vunpack.c.l.b16 %v104
    %v147 = vunpack.c.h.b16 %v104
    %v148 = vunpack.c.l.b16 %v105
    %v149 = vunpack.c.h.b16 %v105
    %v150 = vunpack.c.l.b16 %v106
    %v151 = vunpack.c.h.b16 %v106
    %v152 = vunpack.c.l.b16 %v107
    %v153 = vunpack.c.h.b16 %v107
    %v154 = vunpack.c.l.b16 %v108
    %v155 = vunpack.c.h.b16 %v108
    %v156 = vunpack.c.l.b16 %v109
    %v157 = vunpack.c.h.b16 %v109
    %v158 = vpack.c.b16 %v128, %v126
    %v159 = vpack.c.b16 %v129, %v127
    %v160 = vpack.c.b16 %v132, %v130
    %v161 = vpack.c.b16 %v133, %v131
    %v162 = vpack.c.b16 %v136, %v134
    %v163 = vpack.c.b16 %v137, %v135
    %v164 = vpack.c.b16 %v140, %v138
    %v165 = vpack.c.b16 %v141, %v139
    %v166 = vpack.c.b16 %v144, %v142
    %v167 = vpack.c.b16 %v145, %v143
    %v168 = vpack.c.b16 %v148, %v146
    %v169 = vpack.c.b16 %v149, %v147
    %v170 = vpack.c.b16 %v152, %v150
    %v171 = vpack.c.b16 %v153, %v151
    %v172 = vpack.c.b16 %v156, %v154
    %v173 = vpack.c.b16 %v157, %v155
    %190 = vmatprep.subr.bf16.mxu0 %v173
    %191 = vmatpush1.bf16.msra.mxu0 %v172
    %192 = vmatprep.subr.bf16.mxu0 %v171
    %193 = vmatpush1.bf16.msra.mxu0 %v170
    %194 = vmatprep.subr.bf16.mxu0 %v169
    %195 = vmatpush1.bf16.msra.mxu0 %v168
    %196 = vmatprep.subr.bf16.mxu0 %v167
    %197 = vmatpush1.bf16.msra.mxu0 %v166
    %198 = vmatprep.subr.bf16.mxu0 %v165
    %199 = vmatpush1.bf16.msra.mxu0 %v164
    %200 = vmatprep.subr.bf16.mxu0 %v163
    %201 = vmatpush1.bf16.msra.mxu0 %v162
    %202 = vmatprep.subr.bf16.mxu0 %v161
    %203 = vmatpush1.bf16.msra.mxu0 %v160
    %204 = vmatprep.subr.bf16.mxu0 %v159
    %205 = vmatpush1.bf16.msra.mxu0 %v158
    %206 = vmatprep.subr.bf16.mxu0 0
    %207 = vmatpush2.bf16.msra.mxu0 0
    %208 = vmatprep.subr.bf16.mxu0 0
    %209 = vmatpush2.bf16.msra.mxu0 0
    %210 = vmatprep.subr.bf16.mxu0 0
    %211 = vmatpush2.bf16.msra.mxu0 0
    %212 = vmatprep.subr.bf16.mxu0 0
    %213 = vmatpush2.bf16.msra.mxu0 0
    %214 = vmatprep.subr.bf16.mxu0 0
    %215 = vmatpush2.bf16.msra.mxu0 0
    %216 = vmatprep.subr.bf16.mxu0 0
    %217 = vmatpush2.bf16.msra.mxu0 0
    %218 = vmatprep.subr.bf16.mxu0 0
    %219 = vmatpush2.bf16.msra.mxu0 0
    %220 = vmatprep.subr.bf16.mxu0 0
    %221 = vmatpush2.bf16.msra.mxu0 0
    %222 = vmatprep.mubr.bf16.mxu0 0
    %223 = vmatmul.mubr.bf16.gmra.mxu0 %v92
    %v224 = vpop.f32.mrf.mxu0
    %v225 = vadd.f32 0.0, %v224
    %v226 = vpop.f32.mrf.mxu0
    %v227 = vadd.f32 0.0, %v226
    %v228 = vpop.f32.mrf.mxu0
    %v229 = vadd.f32 0.0, %v228
    %v230 = vpop.f32.mrf.mxu0
    %v231 = vadd.f32 0.0, %v230
    %232 = vmatprep.mubr.bf16.mxu0 0
    %233 = vmatmul.mubr.bf16.gmra.mxu0 %v93
    %v234 = vpop.f32.mrf.mxu0
    %v235 = vadd.f32 0.0, %v234
    %v236 = vpop.f32.mrf.mxu0
    %v237 = vadd.f32 0.0, %v236
    %v238 = vpop.f32.mrf.mxu0
    %v239 = vadd.f32 0.0, %v238
    %v240 = vpop.f32.mrf.mxu0
    %v241 = vadd.f32 0.0, %v240
    %242 = vdwg.mxu0
    %v243 = vld [vmem:[%s5] ss:$8 sm:$0x3]
    %s244 = scalar_lea.vmem %s5, 1
    %v245 = vld [vmem:[%s244] ss:$8 sm:$0x3]
    %v246 = vadd.f32 %v225, %v229
    %v247 = vadd.f32 %v246, %v235
    %v248 = vadd.f32 %v247, %v239
    %v249 = vrot.slane %v248, 4
    %v250 = vadd.f32 %v248, %v249
    %v251 = vrot.slane %v250, 2
    %v252 = vadd.f32 %v250, %v251
    %v253 = vrot.slane %v252, 1
    %v254 = vadd.f32 %v252, %v253
    %v255 = vadd.f32 %v227, %v231
    %v256 = vadd.f32 %v255, %v237
    %v257 = vadd.f32 %v256, %v241
    %v258 = vrot.slane %v257, 4
    %v259 = vadd.f32 %v257, %v258
    %v260 = vrot.slane %v259, 2
    %v261 = vadd.f32 %v259, %v260
    %v262 = vrot.slane %v261, 1
    %v263 = vadd.f32 %v261, %v262
    %v264 = vmul.f32 %v254, 0.033333335
    %v265 = vmul.f32 %v263, 0.033333335
    %v266 = vmul.f32 %v225, %v225
    %v267 = vmul.f32 %v227, %v227
    %v268 = vmul.f32 %v229, %v229
    %v269 = vmul.f32 %v231, %v231
    %v270 = vmul.f32 %v235, %v235
    %v271 = vmul.f32 %v237, %v237
    %v272 = vmul.f32 %v239, %v239
    %v273 = vmul.f32 %v241, %v241
    %v274 = vadd.f32 %v266, %v268
    %v275 = vadd.f32 %v274, %v270
    %v276 = vadd.f32 %v275, %v272
    %v277 = vrot.slane %v276, 4
    %v278 = vadd.f32 %v276, %v277
    %v279 = vrot.slane %v278, 2
    %v280 = vadd.f32 %v278, %v279
    %v281 = vrot.slane %v280, 1
    %v282 = vadd.f32 %v280, %v281
    %v283 = vadd.f32 %v267, %v269
    %v284 = vadd.f32 %v283, %v271
    %v285 = vadd.f32 %v284, %v273
    %v286 = vrot.slane %v285, 4
    %v287 = vadd.f32 %v285, %v286
    %v288 = vrot.slane %v287, 2
    %v289 = vadd.f32 %v287, %v288
    %v290 = vrot.slane %v289, 1
    %v291 = vadd.f32 %v289, %v290
    %v292 = vmul.f32 %v282, 0.033333335
    %v293 = vmul.f32 %v291, 0.033333335
    %v294 = vmul.f32 %v264, %v264
    %v295 = vmul.f32 %v265, %v265
    %v296 = vsub.f32 %v292, %v294
    %v297 = vsub.f32 %v293, %v295
    %v298 = vadd.f32 %v296, 1e-05
    %v299 = vadd.f32 %v297, 1e-05
    %v300 = vrsqrt.pop %v298
    %v301 = vrsqrt.pop %v299
    %v304 = vcombine.low %v300, %v301
    %v306 = vunpack.c.l.s4 1966171168
    %v307 = vunpack.c.0.s8 %v306
    %v308 = vlaneseq
    %v309 = vshrl.u32 %v308, 7
    %v310 = vsub.s32 %v307, %v309
    %v311 = vrot.slane %v304, %v310
    %v313 = vunpack.c.l.s4 1966171168
    %v314 = vunpack.c.0.s8 %v313
    %v315 = vlaneseq
    %v316 = vshrl.u32 %v315, 7
    %v317 = vsub.s32 %v314, %v316
    %v318 = vrot.slane %v311, %v317
    %v320 = vmul.f32 %v243, %v318
    %v322 = vlaneseq
    %v323 = vshrl.u32 %v322, 7
    %v324 = vsub.s32 0, %v323
    %v325 = vrot.slane %v320, %v324
    %v326 = vlaneseq
    %v327 = vshrl.u32 %v326, 7
    %v328 = vsub.s32 1, %v327
    %v329 = vrot.slane %v320, %v328
    %v332 = vmul.f32 %v264, %v325
    %v333 = vmul.f32 %v265, %v329
    %v336 = vcombine.low %v332, %v333
    %v338 = vunpack.c.l.s4 1966171168
    %v339 = vunpack.c.0.s8 %v338
    %v340 = vlaneseq
    %v341 = vshrl.u32 %v340, 7
    %v342 = vsub.s32 %v339, %v341
    %v343 = vrot.slane %v336, %v342
    %v345 = vunpack.c.l.s4 1966171168
    %v346 = vunpack.c.0.s8 %v345
    %v347 = vlaneseq
    %v348 = vshrl.u32 %v347, 7
    %v349 = vsub.s32 %v346, %v348
    %v350 = vrot.slane %v343, %v349
    %v352 = vsub.f32 %v245, %v350
    %v353 = vmul.f32 %v225, %v325
    %v354 = vmul.f32 %v227, %v329
    %v355 = vmul.f32 %v229, %v325
    %v356 = vmul.f32 %v231, %v329
    %v357 = vmul.f32 %v235, %v325
    %v358 = vmul.f32 %v237, %v329
    %v359 = vmul.f32 %v239, %v325
    %v360 = vmul.f32 %v241, %v329
    %v362 = vlaneseq
    %v363 = vshrl.u32 %v362, 7
    %v364 = vsub.s32 0, %v363
    %v365 = vrot.slane %v352, %v364
    %v366 = vlaneseq
    %v367 = vshrl.u32 %v366, 7
    %v368 = vsub.s32 1, %v367
    %v369 = vrot.slane %v352, %v368
    %v372 = vadd.f32 %v353, %v365
    %v373 = vadd.f32 %v354, %v369
    %v374 = vadd.f32 %v355, %v365
    %v375 = vadd.f32 %v356, %v369
    %v376 = vadd.f32 %v357, %v365
    %v377 = vadd.f32 %v358, %v369
    %v378 = vadd.f32 %v359, %v365
    %v379 = vadd.f32 %v360, %v369
    %v380 = vmax.f32 %v372, 0.0
    %v381 = vmax.f32 %v373, 0.0
    %v382 = vmax.f32 %v374, 0.0
    %v383 = vmax.f32 %v375, 0.0
    %v384 = vmax.f32 %v376, 0.0
    %v385 = vmax.f32 %v377, 0.0
    %v386 = vmax.f32 %v378, 0.0
    %v387 = vmax.f32 %v379, 0.0
    %v388 = vsel %vm88, %v380, 0.0
    %v389 = vsel %vm88, %v381, 0.0
    %v390 = vsel %vm89, %v382, 0.0
    %v391 = vsel %vm89, %v383, 0.0
    %v392 = vsel %vm90, %v384, 0.0
    %v393 = vsel %vm90, %v385, 0.0
    %v394 = vsel %vm91, %v386, 0.0
    %v395 = vsel %vm91, %v387, 0.0
    %v396 = vpack.c.bf16 %v390, %v388
    %v397 = vpack.c.bf16 %v391, %v389
    %v398 = vpack.c.bf16 %v394, %v392
    %v399 = vpack.c.bf16 %v395, %v393
    %v400 = vld [vmem:[#allocation4] sm:$0xff]
    %v401 = vld [vmem:[#allocation4 + $0x8] sm:$0xff]
    %v402 = vld [vmem:[#allocation4 + $0x10] sm:$0xff]
    %v403 = vld [vmem:[#allocation4 + $0x18] sm:$0xff]
    %v404 = vld [vmem:[#allocation4 + $0x20] sm:$0xff]
    %v405 = vld [vmem:[#allocation4 + $0x28] sm:$0xff]
    %v406 = vld [vmem:[#allocation4 + $0x30] sm:$0xff]
    %v407 = vld [vmem:[#allocation4 + $0x38] sm:$0xff]
    %v408 = vld [vmem:[#allocation4 + $0x40] sm:$0xff]
    %v409 = vld [vmem:[#allocation4 + $0x48] sm:$0xff]
    %v410 = vld [vmem:[#allocation4 + $0x50] sm:$0xff]
    %v411 = vld [vmem:[#allocation4 + $0x58] sm:$0xff]
    %v412 = vld [vmem:[#allocation4 + $0x60] sm:$0xff]
    %v413 = vld [vmem:[#allocation4 + $0x68] sm:$0xff]
    %v414 = vld [vmem:[#allocation4 + $0x70] sm:$0xff]
    %v415 = vld [vmem:[#allocation4 + $0x78] sm:$0xff]
    %v416 = vld [vmem:[#allocation4 + $0x80] sm:$0xff]
    %v417 = vld [vmem:[#allocation4 + $0x88] sm:$0xff]
    %v418 = vld [vmem:[#allocation4 + $0x90] sm:$0xff]
    %v419 = vld [vmem:[#allocation4 + $0x98] sm:$0xff]
    %v420 = vld [vmem:[#allocation4 + $0xa0] sm:$0xff]
    %v421 = vld [vmem:[#allocation4 + $0xa8] sm:$0xff]
    %v422 = vld [vmem:[#allocation4 + $0xb0] sm:$0xff]
    %v423 = vld [vmem:[#allocation4 + $0xb8] sm:$0xff]
    %v424 = vld [vmem:[#allocation4 + $0xc0] sm:$0xff]
    %v425 = vld [vmem:[#allocation4 + $0xc8] sm:$0xff]
    %v426 = vld [vmem:[#allocation4 + $0xd0] sm:$0xff]
    %v427 = vld [vmem:[#allocation4 + $0xd8] sm:$0xff]
    %v428 = vld [vmem:[#allocation4 + $0xe0] sm:$0xff]
    %v429 = vld [vmem:[#allocation4 + $0xe8] sm:$0xff]
    %v430 = vld [vmem:[#allocation4 + $0xf0] sm:$0xff]
    %v431 = vld [vmem:[#allocation4 + $0xf8] sm:$0xff]
    %v464 = vunpack.c.l.b16 %v400
    %v465 = vunpack.c.h.b16 %v400
    %v466 = vunpack.c.l.b16 %v401
    %v467 = vunpack.c.h.b16 %v401
    %v468 = vunpack.c.l.b16 %v402
    %v469 = vunpack.c.h.b16 %v402
    %v470 = vunpack.c.l.b16 %v403
    %v471 = vunpack.c.h.b16 %v403
    %v472 = vunpack.c.l.b16 %v404
    %v473 = vunpack.c.h.b16 %v404
    %v474 = vunpack.c.l.b16 %v405
    %v475 = vunpack.c.h.b16 %v405
    %v476 = vunpack.c.l.b16 %v406
    %v477 = vunpack.c.h.b16 %v406
    %v478 = vunpack.c.l.b16 %v407
    %v479 = vunpack.c.h.b16 %v407
    %v480 = vunpack.c.l.b16 %v408
    %v481 = vunpack.c.h.b16 %v408
    %v482 = vunpack.c.l.b16 %v409
    %v483 = vunpack.c.h.b16 %v409
    %v484 = vunpack.c.l.b16 %v410
    %v485 = vunpack.c.h.b16 %v410
    %v486 = vunpack.c.l.b16 %v411
    %v487 = vunpack.c.h.b16 %v411
    %v488 = vunpack.c.l.b16 %v412
    %v489 = vunpack.c.h.b16 %v412
    %v490 = vunpack.c.l.b16 %v413
    %v491 = vunpack.c.h.b16 %v413
    %v492 = vunpack.c.l.b16 %v414
    %v493 = vunpack.c.h.b16 %v414
    %v494 = vunpack.c.l.b16 %v415
    %v495 = vunpack.c.h.b16 %v415
    %v496 = vunpack.c.l.b16 %v416
    %v497 = vunpack.c.h.b16 %v416
    %v498 = vunpack.c.l.b16 %v417
    %v499 = vunpack.c.h.b16 %v417
    %v500 = vunpack.c.l.b16 %v418
    %v501 = vunpack.c.h.b16 %v418
    %v502 = vunpack.c.l.b16 %v419
    %v503 = vunpack.c.h.b16 %v419
    %v504 = vunpack.c.l.b16 %v420
    %v505 = vunpack.c.h.b16 %v420
    %v506 = vunpack.c.l.b16 %v421
    %v507 = vunpack.c.h.b16 %v421
    %v508 = vunpack.c.l.b16 %v422
    %v509 = vunpack.c.h.b16 %v422
    %v510 = vunpack.c.l.b16 %v423
    %v511 = vunpack.c.h.b16 %v423
    %v512 = vunpack.c.l.b16 %v424
    %v513 = vunpack.c.h.b16 %v424
    %v514 = vunpack.c.l.b16 %v425
    %v515 = vunpack.c.h.b16 %v425
    %v516 = vunpack.c.l.b16 %v426
    %v517 = vunpack.c.h.b16 %v426
    %v518 = vunpack.c.l.b16 %v427
    %v519 = vunpack.c.h.b16 %v427
    %v520 = vunpack.c.l.b16 %v428
    %v521 = vunpack.c.h.b16 %v428
    %v522 = vunpack.c.l.b16 %v429
    %v523 = vunpack.c.h.b16 %v429
    %v524 = vunpack.c.l.b16 %v430
    %v525 = vunpack.c.h.b16 %v430
    %v526 = vunpack.c.l.b16 %v431
    %v527 = vunpack.c.h.b16 %v431
    %v528 = vpack.c.b16 %v466, %v464
    %v529 = vpack.c.b16 %v467, %v465
    %v530 = vpack.c.b16 %v470, %v468
    %v531 = vpack.c.b16 %v471, %v469
    %v532 = vpack.c.b16 %v474, %v472
    %v533 = vpack.c.b16 %v475, %v473
    %v534 = vpack.c.b16 %v478, %v476
    %v535 = vpack.c.b16 %v479, %v477
    %v536 = vpack.c.b16 %v482, %v480
    %v537 = vpack.c.b16 %v483, %v481
    %v538 = vpack.c.b16 %v486, %v484
    %v539 = vpack.c.b16 %v487, %v485
    %v540 = vpack.c.b16 %v490, %v488
    %v541 = vpack.c.b16 %v491, %v489
    %v542 = vpack.c.b16 %v494, %v492
    %v543 = vpack.c.b16 %v495, %v493
    %v544 = vpack.c.b16 %v498, %v496
    %v545 = vpack.c.b16 %v499, %v497
    %v546 = vpack.c.b16 %v502, %v500
    %v547 = vpack.c.b16 %v503, %v501
    %v548 = vpack.c.b16 %v506, %v504
    %v549 = vpack.c.b16 %v507, %v505
    %v550 = vpack.c.b16 %v510, %v508
    %v551 = vpack.c.b16 %v511, %v509
    %v552 = vpack.c.b16 %v514, %v512
    %v553 = vpack.c.b16 %v515, %v513
    %v554 = vpack.c.b16 %v518, %v516
    %v555 = vpack.c.b16 %v519, %v517
    %v556 = vpack.c.b16 %v522, %v520
    %v557 = vpack.c.b16 %v523, %v521
    %v558 = vpack.c.b16 %v526, %v524
    %v559 = vpack.c.b16 %v527, %v525
    %592 = vmatprep.subr.bf16.mxu0 %v543
    %593 = vmatpush1.bf16.msra.mxu0 %v542
    %594 = vmatprep.subr.bf16.mxu0 %v541
    %595 = vmatpush1.bf16.msra.mxu0 %v540
    %596 = vmatprep.subr.bf16.mxu0 %v539
    %597 = vmatpush1.bf16.msra.mxu0 %v538
    %598 = vmatprep.subr.bf16.mxu0 %v537
    %599 = vmatpush1.bf16.msra.mxu0 %v536
    %600 = vmatprep.subr.bf16.mxu0 %v535
    %601 = vmatpush1.bf16.msra.mxu0 %v534
    %602 = vmatprep.subr.bf16.mxu0 %v533
    %603 = vmatpush1.bf16.msra.mxu0 %v532
    %604 = vmatprep.subr.bf16.mxu0 %v531
    %605 = vmatpush1.bf16.msra.mxu0 %v530
    %606 = vmatprep.subr.bf16.mxu0 %v529
    %607 = vmatpush1.bf16.msra.mxu0 %v528
    %608 = vmatprep.subr.bf16.mxu0 %v559
    %609 = vmatpush2.bf16.msra.mxu0 %v558
    %610 = vmatprep.subr.bf16.mxu0 %v557
    %611 = vmatpush2.bf16.msra.mxu0 %v556
    %612 = vmatprep.subr.bf16.mxu0 %v555
    %613 = vmatpush2.bf16.msra.mxu0 %v554
    %614 = vmatprep.subr.bf16.mxu0 %v553
    %615 = vmatpush2.bf16.msra.mxu0 %v552
    %616 = vmatprep.subr.bf16.mxu0 %v551
    %617 = vmatpush2.bf16.msra.mxu0 %v550
    %618 = vmatprep.subr.bf16.mxu0 %v549
    %619 = vmatpush2.bf16.msra.mxu0 %v548
    %620 = vmatprep.subr.bf16.mxu0 %v547
    %621 = vmatpush2.bf16.msra.mxu0 %v546
    %622 = vmatprep.subr.bf16.mxu0 %v545
    %623 = vmatpush2.bf16.msra.mxu0 %v544
    %624 = vmatprep.mubr.bf16.mxu0 %v397
    %625 = vmatmul.mubr.bf16.gmra.mxu0 %v396
    %v626 = vpop.f32.mrf.mxu0
    %v627 = vadd.f32 0.0, %v626
    %v628 = vpop.f32.mrf.mxu0
    %v629 = vadd.f32 0.0, %v628
    %v630 = vpop.f32.mrf.mxu0
    %v631 = vadd.f32 0.0, %v630
    %v632 = vpop.f32.mrf.mxu0
    %v633 = vadd.f32 0.0, %v632
    %634 = vmatprep.mubr.bf16.mxu0 %v399
    %635 = vmatmul.mubr.bf16.gmra.mxu0 %v398
    %v636 = vpop.f32.mrf.mxu0
    %v637 = vadd.f32 0.0, %v636
    %v638 = vpop.f32.mrf.mxu0
    %v639 = vadd.f32 0.0, %v638
    %v640 = vpop.f32.mrf.mxu0
    %v641 = vadd.f32 0.0, %v640
    %v642 = vpop.f32.mrf.mxu0
    %v643 = vadd.f32 0.0, %v642
    %644 = vdwg.mxu0
    %s645 = scalar_lea.vmem %s5, 2
    %v646 = vld [vmem:[%s645] ss:$8 sm:$0x3]
    %s647 = scalar_lea.vmem %s5, 3
    %v648 = vld [vmem:[%s647] ss:$8 sm:$0x3]
    %v649 = vadd.f32 %v627, %v631
    %v650 = vadd.f32 %v649, %v637
    %v651 = vadd.f32 %v650, %v641
    %v652 = vrot.slane %v651, 4
    %v653 = vadd.f32 %v651, %v652
    %v654 = vrot.slane %v653, 2
    %v655 = vadd.f32 %v653, %v654
    %v656 = vrot.slane %v655, 1
    %v657 = vadd.f32 %v655, %v656
    %v658 = vadd.f32 %v629, %v633
    %v659 = vadd.f32 %v658, %v639
    %v660 = vadd.f32 %v659, %v643
    %v661 = vrot.slane %v660, 4
    %v662 = vadd.f32 %v660, %v661
    %v663 = vrot.slane %v662, 2
    %v664 = vadd.f32 %v662, %v663
    %v665 = vrot.slane %v664, 1
    %v666 = vadd.f32 %v664, %v665
    %v667 = vmul.f32 %v657, 0.033333335
    %v668 = vmul.f32 %v666, 0.033333335
    %v669 = vmul.f32 %v627, %v627
    %v670 = vmul.f32 %v629, %v629
    %v671 = vmul.f32 %v631, %v631
    %v672 = vmul.f32 %v633, %v633
    %v673 = vmul.f32 %v637, %v637
    %v674 = vmul.f32 %v639, %v639
    %v675 = vmul.f32 %v641, %v641
    %v676 = vmul.f32 %v643, %v643
    %v677 = vadd.f32 %v669, %v671
    %v678 = vadd.f32 %v677, %v673
    %v679 = vadd.f32 %v678, %v675
    %v680 = vrot.slane %v679, 4
    %v681 = vadd.f32 %v679, %v680
    %v682 = vrot.slane %v681, 2
    %v683 = vadd.f32 %v681, %v682
    %v684 = vrot.slane %v683, 1
    %v685 = vadd.f32 %v683, %v684
    %v686 = vadd.f32 %v670, %v672
    %v687 = vadd.f32 %v686, %v674
    %v688 = vadd.f32 %v687, %v676
    %v689 = vrot.slane %v688, 4
    %v690 = vadd.f32 %v688, %v689
    %v691 = vrot.slane %v690, 2
    %v692 = vadd.f32 %v690, %v691
    %v693 = vrot.slane %v692, 1
    %v694 = vadd.f32 %v692, %v693
    %v695 = vmul.f32 %v685, 0.033333335
    %v696 = vmul.f32 %v694, 0.033333335
    %v697 = vmul.f32 %v667, %v667
    %v698 = vmul.f32 %v668, %v668
    %v699 = vsub.f32 %v695, %v697
    %v700 = vsub.f32 %v696, %v698
    %v701 = vadd.f32 %v699, 1e-05
    %v702 = vadd.f32 %v700, 1e-05
    %v703 = vrsqrt.pop %v701
    %v704 = vrsqrt.pop %v702
    %v707 = vcombine.low %v703, %v704
    %v709 = vunpack.c.l.s4 1966171168
    %v710 = vunpack.c.0.s8 %v709
    %v711 = vlaneseq
    %v712 = vshrl.u32 %v711, 7
    %v713 = vsub.s32 %v710, %v712
    %v714 = vrot.slane %v707, %v713
    %v716 = vunpack.c.l.s4 1966171168
    %v717 = vunpack.c.0.s8 %v716
    %v718 = vlaneseq
    %v719 = vshrl.u32 %v718, 7
    %v720 = vsub.s32 %v717, %v719
    %v721 = vrot.slane %v714, %v720
    %v723 = vmul.f32 %v646, %v721
    %v725 = vlaneseq
    %v726 = vshrl.u32 %v725, 7
    %v727 = vsub.s32 0, %v726
    %v728 = vrot.slane %v723, %v727
    %v729 = vlaneseq
    %v730 = vshrl.u32 %v729, 7
    %v731 = vsub.s32 1, %v730
    %v732 = vrot.slane %v723, %v731
    %v735 = vmul.f32 %v667, %v728
    %v736 = vmul.f32 %v668, %v732
    %v739 = vcombine.low %v735, %v736
    %v741 = vunpack.c.l.s4 1966171168
    %v742 = vunpack.c.0.s8 %v741
    %v743 = vlaneseq
    %v744 = vshrl.u32 %v743, 7
    %v745 = vsub.s32 %v742, %v744
    %v746 = vrot.slane %v739, %v745
    %v748 = vunpack.c.l.s4 1966171168
    %v749 = vunpack.c.0.s8 %v748
    %v750 = vlaneseq
    %v751 = vshrl.u32 %v750, 7
    %v752 = vsub.s32 %v749, %v751
    %v753 = vrot.slane %v746, %v752
    %v755 = vsub.f32 %v648, %v753
    %v756 = vmul.f32 %v627, %v728
    %v757 = vmul.f32 %v629, %v732
    %v758 = vmul.f32 %v631, %v728
    %v759 = vmul.f32 %v633, %v732
    %v760 = vmul.f32 %v637, %v728
    %v761 = vmul.f32 %v639, %v732
    %v762 = vmul.f32 %v641, %v728
    %v763 = vmul.f32 %v643, %v732
    %v765 = vlaneseq
    %v766 = vshrl.u32 %v765, 7
    %v767 = vsub.s32 0, %v766
    %v768 = vrot.slane %v755, %v767
    %v769 = vlaneseq
    %v770 = vshrl.u32 %v769, 7
    %v771 = vsub.s32 1, %v770
    %v772 = vrot.slane %v755, %v771
    %v775 = vadd.f32 %v756, %v768
    %v776 = vadd.f32 %v757, %v772
    %v777 = vadd.f32 %v758, %v768
    %v778 = vadd.f32 %v759, %v772
    %v779 = vadd.f32 %v760, %v768
    %v780 = vadd.f32 %v761, %v772
    %v781 = vadd.f32 %v762, %v768
    %v782 = vadd.f32 %v763, %v772
    %v783 = vmax.f32 %v775, 0.0
    %v784 = vmax.f32 %v776, 0.0
    %v785 = vmax.f32 %v777, 0.0
    %v786 = vmax.f32 %v778, 0.0
    %v787 = vmax.f32 %v779, 0.0
    %v788 = vmax.f32 %v780, 0.0
    %v789 = vmax.f32 %v781, 0.0
    %v790 = vmax.f32 %v782, 0.0
    %v791 = vsel %vm88, %v783, 0.0
    %v792 = vsel %vm88, %v784, 0.0
    %v793 = vsel %vm89, %v785, 0.0
    %v794 = vsel %vm89, %v786, 0.0
    %v795 = vsel %vm90, %v787, 0.0
    %v796 = vsel %vm90, %v788, 0.0
    %v797 = vsel %vm91, %v789, 0.0
    %v798 = vsel %vm91, %v790, 0.0
    %v799 = vpack.c.bf16 %v793, %v791
    %v800 = vpack.c.bf16 %v794, %v792
    %v801 = vpack.c.bf16 %v797, %v795
    %v802 = vpack.c.bf16 %v798, %v796
    %v803 = vld [vmem:[#allocation6] sm:$0xff]
    %v804 = vld [vmem:[#allocation6 + $0x8] sm:$0xff]
    %v805 = vld [vmem:[#allocation6 + $0x10] sm:$0xff]
    %v806 = vld [vmem:[#allocation6 + $0x18] sm:$0xff]
    %v807 = vld [vmem:[#allocation6 + $0x20] sm:$0xff]
    %v808 = vld [vmem:[#allocation6 + $0x28] sm:$0xff]
    %v809 = vld [vmem:[#allocation6 + $0x30] sm:$0xff]
    %v810 = vld [vmem:[#allocation6 + $0x38] sm:$0xff]
    %v811 = vld [vmem:[#allocation6 + $0x40] sm:$0xff]
    %v812 = vld [vmem:[#allocation6 + $0x48] sm:$0xff]
    %v813 = vld [vmem:[#allocation6 + $0x50] sm:$0xff]
    %v814 = vld [vmem:[#allocation6 + $0x58] sm:$0xff]
    %v815 = vld [vmem:[#allocation6 + $0x60] sm:$0xff]
    %v816 = vld [vmem:[#allocation6 + $0x68] sm:$0xff]
    %v817 = vld [vmem:[#allocation6 + $0x70] sm:$0xff]
    %v818 = vld [vmem:[#allocation6 + $0x78] sm:$0xff]
    %v819 = vld [vmem:[#allocation6 + $0x80] sm:$0xff]
    %v820 = vld [vmem:[#allocation6 + $0x88] sm:$0xff]
    %v821 = vld [vmem:[#allocation6 + $0x90] sm:$0xff]
    %v822 = vld [vmem:[#allocation6 + $0x98] sm:$0xff]
    %v823 = vld [vmem:[#allocation6 + $0xa0] sm:$0xff]
    %v824 = vld [vmem:[#allocation6 + $0xa8] sm:$0xff]
    %v825 = vld [vmem:[#allocation6 + $0xb0] sm:$0xff]
    %v826 = vld [vmem:[#allocation6 + $0xb8] sm:$0xff]
    %v827 = vld [vmem:[#allocation6 + $0xc0] sm:$0xff]
    %v828 = vld [vmem:[#allocation6 + $0xc8] sm:$0xff]
    %v829 = vld [vmem:[#allocation6 + $0xd0] sm:$0xff]
    %v830 = vld [vmem:[#allocation6 + $0xd8] sm:$0xff]
    %v831 = vld [vmem:[#allocation6 + $0xe0] sm:$0xff]
    %v832 = vld [vmem:[#allocation6 + $0xe8] sm:$0xff]
    %v833 = vld [vmem:[#allocation6 + $0xf0] sm:$0xff]
    %v834 = vld [vmem:[#allocation6 + $0xf8] sm:$0xff]
    %v867 = vunpack.c.l.b16 %v803
    %v868 = vunpack.c.h.b16 %v803
    %v869 = vunpack.c.l.b16 %v804
    %v870 = vunpack.c.h.b16 %v804
    %v871 = vunpack.c.l.b16 %v805
    %v872 = vunpack.c.h.b16 %v805
    %v873 = vunpack.c.l.b16 %v806
    %v874 = vunpack.c.h.b16 %v806
    %v875 = vunpack.c.l.b16 %v807
    %v876 = vunpack.c.h.b16 %v807
    %v877 = vunpack.c.l.b16 %v808
    %v878 = vunpack.c.h.b16 %v808
    %v879 = vunpack.c.l.b16 %v809
    %v880 = vunpack.c.h.b16 %v809
    %v881 = vunpack.c.l.b16 %v810
    %v882 = vunpack.c.h.b16 %v810
    %v883 = vunpack.c.l.b16 %v811
    %v884 = vunpack.c.h.b16 %v811
    %v885 = vunpack.c.l.b16 %v812
    %v886 = vunpack.c.h.b16 %v812
    %v887 = vunpack.c.l.b16 %v813
    %v888 = vunpack.c.h.b16 %v813
    %v889 = vunpack.c.l.b16 %v814
    %v890 = vunpack.c.h.b16 %v814
    %v891 = vunpack.c.l.b16 %v815
    %v892 = vunpack.c.h.b16 %v815
    %v893 = vunpack.c.l.b16 %v816
    %v894 = vunpack.c.h.b16 %v816
    %v895 = vunpack.c.l.b16 %v817
    %v896 = vunpack.c.h.b16 %v817
    %v897 = vunpack.c.l.b16 %v818
    %v898 = vunpack.c.h.b16 %v818
    %v899 = vunpack.c.l.b16 %v819
    %v900 = vunpack.c.h.b16 %v819
    %v901 = vunpack.c.l.b16 %v820
    %v902 = vunpack.c.h.b16 %v820
    %v903 = vunpack.c.l.b16 %v821
    %v904 = vunpack.c.h.b16 %v821
    %v905 = vunpack.c.l.b16 %v822
    %v906 = vunpack.c.h.b16 %v822
    %v907 = vunpack.c.l.b16 %v823
    %v908 = vunpack.c.h.b16 %v823
    %v909 = vunpack.c.l.b16 %v824
    %v910 = vunpack.c.h.b16 %v824
    %v911 = vunpack.c.l.b16 %v825
    %v912 = vunpack.c.h.b16 %v825
    %v913 = vunpack.c.l.b16 %v826
    %v914 = vunpack.c.h.b16 %v826
    %v915 = vunpack.c.l.b16 %v827
    %v916 = vunpack.c.h.b16 %v827
    %v917 = vunpack.c.l.b16 %v828
    %v918 = vunpack.c.h.b16 %v828
    %v919 = vunpack.c.l.b16 %v829
    %v920 = vunpack.c.h.b16 %v829
    %v921 = vunpack.c.l.b16 %v830
    %v922 = vunpack.c.h.b16 %v830
    %v923 = vunpack.c.l.b16 %v831
    %v924 = vunpack.c.h.b16 %v831
    %v925 = vunpack.c.l.b16 %v832
    %v926 = vunpack.c.h.b16 %v832
    %v927 = vunpack.c.l.b16 %v833
    %v928 = vunpack.c.h.b16 %v833
    %v929 = vunpack.c.l.b16 %v834
    %v930 = vunpack.c.h.b16 %v834
    %v931 = vpack.c.b16 %v869, %v867
    %v932 = vpack.c.b16 %v870, %v868
    %v933 = vpack.c.b16 %v873, %v871
    %v934 = vpack.c.b16 %v874, %v872
    %v935 = vpack.c.b16 %v877, %v875
    %v936 = vpack.c.b16 %v878, %v876
    %v937 = vpack.c.b16 %v881, %v879
    %v938 = vpack.c.b16 %v882, %v880
    %v939 = vpack.c.b16 %v885, %v883
    %v940 = vpack.c.b16 %v886, %v884
    %v941 = vpack.c.b16 %v889, %v887
    %v942 = vpack.c.b16 %v890, %v888
    %v943 = vpack.c.b16 %v893, %v891
    %v944 = vpack.c.b16 %v894, %v892
    %v945 = vpack.c.b16 %v897, %v895
    %v946 = vpack.c.b16 %v898, %v896
    %v947 = vpack.c.b16 %v901, %v899
    %v948 = vpack.c.b16 %v902, %v900
    %v949 = vpack.c.b16 %v905, %v903
    %v950 = vpack.c.b16 %v906, %v904
    %v951 = vpack.c.b16 %v909, %v907
    %v952 = vpack.c.b16 %v910, %v908
    %v953 = vpack.c.b16 %v913, %v911
    %v954 = vpack.c.b16 %v914, %v912
    %v955 = vpack.c.b16 %v917, %v915
    %v956 = vpack.c.b16 %v918, %v916
    %v957 = vpack.c.b16 %v921, %v919
    %v958 = vpack.c.b16 %v922, %v920
    %v959 = vpack.c.b16 %v925, %v923
    %v960 = vpack.c.b16 %v926, %v924
    %v961 = vpack.c.b16 %v929, %v927
    %v962 = vpack.c.b16 %v930, %v928
    %995 = vmatprep.subr.bf16.mxu0 %v946
    %996 = vmatpush1.bf16.msra.mxu0 %v945
    %997 = vmatprep.subr.bf16.mxu0 %v944
    %998 = vmatpush1.bf16.msra.mxu0 %v943
    %999 = vmatprep.subr.bf16.mxu0 %v942
    %1000 = vmatpush1.bf16.msra.mxu0 %v941
    %1001 = vmatprep.subr.bf16.mxu0 %v940
    %1002 = vmatpush1.bf16.msra.mxu0 %v939
    %1003 = vmatprep.subr.bf16.mxu0 %v938
    %1004 = vmatpush1.bf16.msra.mxu0 %v937
    %1005 = vmatprep.subr.bf16.mxu0 %v936
    %1006 = vmatpush1.bf16.msra.mxu0 %v935
    %1007 = vmatprep.subr.bf16.mxu0 %v934
    %1008 = vmatpush1.bf16.msra.mxu0 %v933
    %1009 = vmatprep.subr.bf16.mxu0 %v932
    %1010 = vmatpush1.bf16.msra.mxu0 %v931
    %1011 = vmatprep.subr.bf16.mxu0 %v962
    %1012 = vmatpush2.bf16.msra.mxu0 %v961
    %1013 = vmatprep.subr.bf16.mxu0 %v960
    %1014 = vmatpush2.bf16.msra.mxu0 %v959
    %1015 = vmatprep.subr.bf16.mxu0 %v958
    %1016 = vmatpush2.bf16.msra.mxu0 %v957
    %1017 = vmatprep.subr.bf16.mxu0 %v956
    %1018 = vmatpush2.bf16.msra.mxu0 %v955
    %1019 = vmatprep.subr.bf16.mxu0 %v954
    %1020 = vmatpush2.bf16.msra.mxu0 %v953
    %1021 = vmatprep.subr.bf16.mxu0 %v952
    %1022 = vmatpush2.bf16.msra.mxu0 %v951
    %1023 = vmatprep.subr.bf16.mxu0 %v950
    %1024 = vmatpush2.bf16.msra.mxu0 %v949
    %1025 = vmatprep.subr.bf16.mxu0 %v948
    %1026 = vmatpush2.bf16.msra.mxu0 %v947
    %1027 = vmatprep.mubr.bf16.mxu0 %v800
    %1028 = vmatmul.mubr.bf16.gmra.mxu0 %v799
    %v1029 = vpop.f32.mrf.mxu0
    %v1030 = vadd.f32 0.0, %v1029
    %v1031 = vpop.f32.mrf.mxu0
    %v1032 = vadd.f32 0.0, %v1031
    %v1033 = vpop.f32.mrf.mxu0
    %v1034 = vadd.f32 0.0, %v1033
    %v1035 = vpop.f32.mrf.mxu0
    %v1036 = vadd.f32 0.0, %v1035
    %1037 = vmatprep.mubr.bf16.mxu0 %v802
    %1038 = vmatmul.mubr.bf16.gmra.mxu0 %v801
    %v1039 = vpop.f32.mrf.mxu0
    %v1040 = vadd.f32 0.0, %v1039
    %v1041 = vpop.f32.mrf.mxu0
    %v1042 = vadd.f32 0.0, %v1041
    %v1043 = vpop.f32.mrf.mxu0
    %v1044 = vadd.f32 0.0, %v1043
    %v1045 = vpop.f32.mrf.mxu0
    %v1046 = vadd.f32 0.0, %v1045
    %1047 = vdwg.mxu0
    %s1048 = scalar_lea.vmem %s5, 4
    %v1049 = vld [vmem:[%s1048] ss:$8 sm:$0x3]
    %s1050 = scalar_lea.vmem %s5, 5
    %v1051 = vld [vmem:[%s1050] ss:$8 sm:$0x3]
    %v1052 = vadd.f32 %v1030, %v1034
    %v1053 = vadd.f32 %v1052, %v1040
    %v1054 = vadd.f32 %v1053, %v1044
    %v1055 = vrot.slane %v1054, 4
    %v1056 = vadd.f32 %v1054, %v1055
    %v1057 = vrot.slane %v1056, 2
    %v1058 = vadd.f32 %v1056, %v1057
    %v1059 = vrot.slane %v1058, 1
    %v1060 = vadd.f32 %v1058, %v1059
    %v1061 = vadd.f32 %v1032, %v1036
    %v1062 = vadd.f32 %v1061, %v1042
    %v1063 = vadd.f32 %v1062, %v1046
    %v1064 = vrot.slane %v1063, 4
    %v1065 = vadd.f32 %v1063, %v1064
    %v1066 = vrot.slane %v1065, 2
    %v1067 = vadd.f32 %v1065, %v1066
    %v1068 = vrot.slane %v1067, 1
    %v1069 = vadd.f32 %v1067, %v1068
    %v1070 = vmul.f32 %v1060, 0.033333335
    %v1071 = vmul.f32 %v1069, 0.033333335
    %v1072 = vmul.f32 %v1030, %v1030
    %v1073 = vmul.f32 %v1032, %v1032
    %v1074 = vmul.f32 %v1034, %v1034
    %v1075 = vmul.f32 %v1036, %v1036
    %v1076 = vmul.f32 %v1040, %v1040
    %v1077 = vmul.f32 %v1042, %v1042
    %v1078 = vmul.f32 %v1044, %v1044
    %v1079 = vmul.f32 %v1046, %v1046
    %v1080 = vadd.f32 %v1072, %v1074
    %v1081 = vadd.f32 %v1080, %v1076
    %v1082 = vadd.f32 %v1081, %v1078
    %v1083 = vrot.slane %v1082, 4
    %v1084 = vadd.f32 %v1082, %v1083
    %v1085 = vrot.slane %v1084, 2
    %v1086 = vadd.f32 %v1084, %v1085
    %v1087 = vrot.slane %v1086, 1
    %v1088 = vadd.f32 %v1086, %v1087
    %v1089 = vadd.f32 %v1073, %v1075
    %v1090 = vadd.f32 %v1089, %v1077
    %v1091 = vadd.f32 %v1090, %v1079
    %v1092 = vrot.slane %v1091, 4
    %v1093 = vadd.f32 %v1091, %v1092
    %v1094 = vrot.slane %v1093, 2
    %v1095 = vadd.f32 %v1093, %v1094
    %v1096 = vrot.slane %v1095, 1
    %v1097 = vadd.f32 %v1095, %v1096
    %v1098 = vmul.f32 %v1088, 0.033333335
    %v1099 = vmul.f32 %v1097, 0.033333335
    %v1100 = vmul.f32 %v1070, %v1070
    %v1101 = vmul.f32 %v1071, %v1071
    %v1102 = vsub.f32 %v1098, %v1100
    %v1103 = vsub.f32 %v1099, %v1101
    %v1104 = vadd.f32 %v1102, 1e-05
    %v1105 = vadd.f32 %v1103, 1e-05
    %v1106 = vrsqrt.pop %v1104
    %v1107 = vrsqrt.pop %v1105
    %v1110 = vcombine.low %v1106, %v1107
    %v1112 = vunpack.c.l.s4 1966171168
    %v1113 = vunpack.c.0.s8 %v1112
    %v1114 = vlaneseq
    %v1115 = vshrl.u32 %v1114, 7
    %v1116 = vsub.s32 %v1113, %v1115
    %v1117 = vrot.slane %v1110, %v1116
    %v1119 = vunpack.c.l.s4 1966171168
    %v1120 = vunpack.c.0.s8 %v1119
    %v1121 = vlaneseq
    %v1122 = vshrl.u32 %v1121, 7
    %v1123 = vsub.s32 %v1120, %v1122
    %v1124 = vrot.slane %v1117, %v1123
    %v1126 = vmul.f32 %v1049, %v1124
    %v1128 = vlaneseq
    %v1129 = vshrl.u32 %v1128, 7
    %v1130 = vsub.s32 0, %v1129
    %v1131 = vrot.slane %v1126, %v1130
    %v1132 = vlaneseq
    %v1133 = vshrl.u32 %v1132, 7
    %v1134 = vsub.s32 1, %v1133
    %v1135 = vrot.slane %v1126, %v1134
    %v1138 = vmul.f32 %v1070, %v1131
    %v1139 = vmul.f32 %v1071, %v1135
    %v1142 = vcombine.low %v1138, %v1139
    %v1144 = vunpack.c.l.s4 1966171168
    %v1145 = vunpack.c.0.s8 %v1144
    %v1146 = vlaneseq
    %v1147 = vshrl.u32 %v1146, 7
    %v1148 = vsub.s32 %v1145, %v1147
    %v1149 = vrot.slane %v1142, %v1148
    %v1151 = vunpack.c.l.s4 1966171168
    %v1152 = vunpack.c.0.s8 %v1151
    %v1153 = vlaneseq
    %v1154 = vshrl.u32 %v1153, 7
    %v1155 = vsub.s32 %v1152, %v1154
    %v1156 = vrot.slane %v1149, %v1155
    %v1158 = vsub.f32 %v1051, %v1156
    %v1159 = vmul.f32 %v1030, %v1131
    %v1160 = vmul.f32 %v1032, %v1135
    %v1161 = vmul.f32 %v1034, %v1131
    %v1162 = vmul.f32 %v1036, %v1135
    %v1163 = vmul.f32 %v1040, %v1131
    %v1164 = vmul.f32 %v1042, %v1135
    %v1165 = vmul.f32 %v1044, %v1131
    %v1166 = vmul.f32 %v1046, %v1135
    %v1168 = vlaneseq
    %v1169 = vshrl.u32 %v1168, 7
    %v1170 = vsub.s32 0, %v1169
    %v1171 = vrot.slane %v1158, %v1170
    %v1172 = vlaneseq
    %v1173 = vshrl.u32 %v1172, 7
    %v1174 = vsub.s32 1, %v1173
    %v1175 = vrot.slane %v1158, %v1174
    %v1178 = vadd.f32 %v1159, %v1171
    %v1179 = vadd.f32 %v1160, %v1175
    %v1180 = vadd.f32 %v1161, %v1171
    %v1181 = vadd.f32 %v1162, %v1175
    %v1182 = vadd.f32 %v1163, %v1171
    %v1183 = vadd.f32 %v1164, %v1175
    %v1184 = vadd.f32 %v1165, %v1171
    %v1185 = vadd.f32 %v1166, %v1175
    %v1186 = vmax.f32 %v1178, 0.0
    %v1187 = vmax.f32 %v1179, 0.0
    %v1188 = vmax.f32 %v1180, 0.0
    %v1189 = vmax.f32 %v1181, 0.0
    %v1190 = vmax.f32 %v1182, 0.0
    %v1191 = vmax.f32 %v1183, 0.0
    %v1192 = vmax.f32 %v1184, 0.0
    %v1193 = vmax.f32 %v1185, 0.0
    %v1194 = vsel %vm88, %v1186, 0.0
    %v1195 = vsel %vm88, %v1187, 0.0
    %v1196 = vsel %vm89, %v1188, 0.0
    %v1197 = vsel %vm89, %v1189, 0.0
    %v1198 = vsel %vm90, %v1190, 0.0
    %v1199 = vsel %vm90, %v1191, 0.0
    %v1200 = vsel %vm91, %v1192, 0.0
    %v1201 = vsel %vm91, %v1193, 0.0
    %v1202 = vpack.c.bf16 %v1196, %v1194
    %v1203 = vpack.c.bf16 %v1197, %v1195
    %v1204 = vpack.c.bf16 %v1200, %v1198
    %v1205 = vpack.c.bf16 %v1201, %v1199
    %v1206 = vld [vmem:[#allocation7] sm:$0xf]
    %v1207 = vld [vmem:[#allocation7 + $0x4] sm:$0xf]
    %v1208 = vld [vmem:[#allocation7 + $0x8] sm:$0xf]
    %v1209 = vld [vmem:[#allocation7 + $0xc] sm:$0xf]
    %v1210 = vld [vmem:[#allocation7 + $0x10] sm:$0xf]
    %v1211 = vld [vmem:[#allocation7 + $0x14] sm:$0xf]
    %v1212 = vld [vmem:[#allocation7 + $0x18] sm:$0xf]
    %v1213 = vld [vmem:[#allocation7 + $0x1c] sm:$0xf]
    %v1214 = vld [vmem:[#allocation7 + $0x20] sm:$0xf]
    %v1215 = vld [vmem:[#allocation7 + $0x24] sm:$0xf]
    %v1216 = vld [vmem:[#allocation7 + $0x28] sm:$0xf]
    %v1217 = vld [vmem:[#allocation7 + $0x2c] sm:$0xf]
    %v1218 = vld [vmem:[#allocation7 + $0x30] sm:$0xf]
    %v1219 = vld [vmem:[#allocation7 + $0x34] sm:$0xf]
    %v1220 = vld [vmem:[#allocation7 + $0x38] sm:$0xf]
    %v1221 = vld [vmem:[#allocation7 + $0x3c] sm:$0xf]
    %v1222 = vld [vmem:[#allocation7 + $0x40] sm:$0xf]
    %v1223 = vld [vmem:[#allocation7 + $0x44] sm:$0xf]
    %v1224 = vld [vmem:[#allocation7 + $0x48] sm:$0xf]
    %v1225 = vld [vmem:[#allocation7 + $0x4c] sm:$0xf]
    %v1226 = vld [vmem:[#allocation7 + $0x50] sm:$0xf]
    %v1227 = vld [vmem:[#allocation7 + $0x54] sm:$0xf]
    %v1228 = vld [vmem:[#allocation7 + $0x58] sm:$0xf]
    %v1229 = vld [vmem:[#allocation7 + $0x5c] sm:$0xf]
    %v1230 = vld [vmem:[#allocation7 + $0x60] sm:$0xf]
    %v1231 = vld [vmem:[#allocation7 + $0x64] sm:$0xf]
    %v1232 = vld [vmem:[#allocation7 + $0x68] sm:$0xf]
    %v1233 = vld [vmem:[#allocation7 + $0x6c] sm:$0xf]
    %v1234 = vld [vmem:[#allocation7 + $0x70] sm:$0xf]
    %v1235 = vld [vmem:[#allocation7 + $0x74] sm:$0xf]
    %v1236 = vld [vmem:[#allocation7 + $0x78] sm:$0xf]
    %v1237 = vld [vmem:[#allocation7 + $0x7c] sm:$0xf]
    %v1238 = vld [vmem:[%s5 + $0x6] ss:$0 sm:$0xff]
    %v1271 = vunpack.c.l.b16 %v1206
    %v1272 = vunpack.c.l.b16 %v1207
    %v1273 = vunpack.c.l.b16 %v1208
    %v1274 = vunpack.c.l.b16 %v1209
    %v1275 = vunpack.c.l.b16 %v1210
    %v1276 = vunpack.c.l.b16 %v1211
    %v1277 = vunpack.c.l.b16 %v1212
    %v1278 = vunpack.c.l.b16 %v1213
    %v1279 = vunpack.c.l.b16 %v1214
    %v1280 = vunpack.c.l.b16 %v1215
    %v1281 = vunpack.c.l.b16 %v1216
    %v1282 = vunpack.c.l.b16 %v1217
    %v1283 = vunpack.c.l.b16 %v1218
    %v1284 = vunpack.c.l.b16 %v1219
    %v1285 = vunpack.c.l.b16 %v1220
    %v1286 = vunpack.c.l.b16 %v1221
    %v1287 = vunpack.c.l.b16 %v1222
    %v1288 = vunpack.c.l.b16 %v1223
    %v1289 = vunpack.c.l.b16 %v1224
    %v1290 = vunpack.c.l.b16 %v1225
    %v1291 = vunpack.c.l.b16 %v1226
    %v1292 = vunpack.c.l.b16 %v1227
    %v1293 = vunpack.c.l.b16 %v1228
    %v1294 = vunpack.c.l.b16 %v1229
    %v1295 = vunpack.c.l.b16 %v1230
    %v1296 = vunpack.c.l.b16 %v1231
    %v1297 = vunpack.c.l.b16 %v1232
    %v1298 = vunpack.c.l.b16 %v1233
    %v1299 = vunpack.c.l.b16 %v1234
    %v1300 = vunpack.c.l.b16 %v1235
    %v1301 = vunpack.c.l.b16 %v1236
    %v1302 = vunpack.c.l.b16 %v1237
    %v1303 = vpack.c.b16 %v1272, %v1271
    %v1304 = vpack.c.b16 %v1274, %v1273
    %v1305 = vpack.c.b16 %v1276, %v1275
    %v1306 = vpack.c.b16 %v1278, %v1277
    %v1307 = vpack.c.b16 %v1280, %v1279
    %v1308 = vpack.c.b16 %v1282, %v1281
    %v1309 = vpack.c.b16 %v1284, %v1283
    %v1310 = vpack.c.b16 %v1286, %v1285
    %v1311 = vpack.c.b16 %v1288, %v1287
    %v1312 = vpack.c.b16 %v1290, %v1289
    %v1313 = vpack.c.b16 %v1292, %v1291
    %v1314 = vpack.c.b16 %v1294, %v1293
    %v1315 = vpack.c.b16 %v1296, %v1295
    %v1316 = vpack.c.b16 %v1298, %v1297
    %v1317 = vpack.c.b16 %v1300, %v1299
    %v1318 = vpack.c.b16 %v1302, %v1301
    %1335 = vmatprep.subr.bf16.mxu0 0
    %1336 = vmatpush1.bf16.msra.mxu0 %v1310
    %1337 = vmatprep.subr.bf16.mxu0 0
    %1338 = vmatpush1.bf16.msra.mxu0 %v1309
    %1339 = vmatprep.subr.bf16.mxu0 0
    %1340 = vmatpush1.bf16.msra.mxu0 %v1308
    %1341 = vmatprep.subr.bf16.mxu0 0
    %1342 = vmatpush1.bf16.msra.mxu0 %v1307
    %1343 = vmatprep.subr.bf16.mxu0 0
    %1344 = vmatpush1.bf16.msra.mxu0 %v1306
    %1345 = vmatprep.subr.bf16.mxu0 0
    %1346 = vmatpush1.bf16.msra.mxu0 %v1305
    %1347 = vmatprep.subr.bf16.mxu0 0
    %1348 = vmatpush1.bf16.msra.mxu0 %v1304
    %1349 = vmatprep.subr.bf16.mxu0 0
    %1350 = vmatpush1.bf16.msra.mxu0 %v1303
    %1351 = vmatprep.subr.bf16.mxu0 0
    %1352 = vmatpush2.bf16.msra.mxu0 %v1318
    %1353 = vmatprep.subr.bf16.mxu0 0
    %1354 = vmatpush2.bf16.msra.mxu0 %v1317
    %1355 = vmatprep.subr.bf16.mxu0 0
    %1356 = vmatpush2.bf16.msra.mxu0 %v1316
    %1357 = vmatprep.subr.bf16.mxu0 0
    %1358 = vmatpush2.bf16.msra.mxu0 %v1315
    %1359 = vmatprep.subr.bf16.mxu0 0
    %1360 = vmatpush2.bf16.msra.mxu0 %v1314
    %1361 = vmatprep.subr.bf16.mxu0 0
    %1362 = vmatpush2.bf16.msra.mxu0 %v1313
    %1363 = vmatprep.subr.bf16.mxu0 0
    %1364 = vmatpush2.bf16.msra.mxu0 %v1312
    %1365 = vmatprep.subr.bf16.mxu0 0
    %1366 = vmatpush2.bf16.msra.mxu0 %v1311
    %1367 = vmatprep.mubr.bf16.mxu0 %v1203
    %1368 = vmatmul.mubr.bf16.gmra.mxu0 %v1202
    %v1369 = vpop.f32.mrf.mxu0
    %v1370 = vadd.f32 %v1238, %v1369
    %v1371 = vpop.f32.mrf.mxu0
    %v1372 = vpop.f32.mrf.mxu0
    %v1373 = vadd.f32 %v1238, %v1372
    %v1374 = vpop.f32.mrf.mxu0
    %1375 = vmatprep.mubr.bf16.mxu0 %v1205
    %1376 = vmatmul.mubr.bf16.gmra.mxu0 %v1204
    %v1377 = vpop.f32.mrf.mxu0
    %v1378 = vadd.f32 %v1238, %v1377
    %v1379 = vpop.f32.mrf.mxu0
    %v1380 = vpop.f32.mrf.mxu0
    %v1381 = vadd.f32 %v1238, %v1380
    %v1382 = vpop.f32.mrf.mxu0
    %1383 = vdwg.mxu0
    %v1384 = vxor.u32 %v1370, 2147483648
    %v1385 = vxor.u32 %v1373, 2147483648
    %v1386 = vxor.u32 %v1378, 2147483648
    %v1387 = vxor.u32 %v1381, 2147483648
    %v1388 = vmul.f32 %v1384, 1.442695
    %v1389 = vpow.pop %v1388
    %v1390 = vmul.f32 %v1385, 1.442695
    %v1391 = vpow.pop %v1390
    %v1392 = vmul.f32 %v1386, 1.442695
    %v1393 = vpow.pop %v1392
    %v1394 = vmul.f32 %v1387, 1.442695
    %v1395 = vpow.pop %v1394
    %v1396 = vadd.f32 %v1389, 1.0
    %v1397 = vadd.f32 %v1391, 1.0
    %v1398 = vadd.f32 %v1393, 1.0
    %v1399 = vadd.f32 %v1395, 1.0
    %v1400 = vrcp.pop %v1396
    %v1401 = vmul.f32 1.0, %v1400
    %v1402 = vrcp.pop %v1397
    %v1403 = vmul.f32 1.0, %v1402
    %v1404 = vrcp.pop %v1398
    %v1405 = vmul.f32 1.0, %v1404
    %v1406 = vrcp.pop %v1399
    %v1407 = vmul.f32 1.0, %v1406
    %1408 = vst [vmem:[%s6] sm:$0xff] %v1401
    %1409 = vst [vmem:[%s6 + $0x8] sm:$0xff] %v1403
    %1410 = vst [vmem:[%s6 + $0x10] sm:$0xff] %v1405
    %1411 = vst [vmem:[%s6 + $0x18] sm:$0xff] %v1407
    // Predicated region
    $region42: #{face_mi_forward.1} parent=1 // pred_check
      _
    $region43: #{face_mi_forward.1} parent=1 // pred_check_branch
      %1413 = sbr.rel (0) target = $region45
    $region44: #{face_mi_forward.1} parent=1 // pred_region
      _
    $region45: #{face_mi_forward.1} parent=1 // pred_fallthru
      _
    // Predicated region
    $region46: #{face_mi_forward.1} parent=1 // pred_check
      _
    $region47: #{face_mi_forward.1} parent=1 // pred_check_branch
      %1415 = sbr.rel (0) target = $region49
    $region48: #{face_mi_forward.1} parent=1 // pred_region
      _
    $region49: #{face_mi_forward.1} parent=1 // pred_fallthru
      _
    %1416 = vsyncpa [#allocation3], 1
    %1417 = vsyncpa [#allocation5], 1
    %1418 = vsyncpa [#allocation8], 1

</llo_original>
